<compile_context>
chip_gen: v5e
topology: v5e:2x2
jax: 0.10.0
libtpu: 0.0.40
codegen_flags: <defaults>
</compile_context>

<pallas_src>
import functools

import jax
import jax.numpy as jnp
from jax.experimental import pallas as pl
from jax.experimental.pallas import tpu as pltpu


# ----------------------------------------------------------------------------
# Tiled linear kernel:  y = x @ w_t + b   (fused QKV projection and out_proj).
# ----------------------------------------------------------------------------
def _linear_kernel(x_ref, w_ref, b_ref, o_ref, acc_ref):
    @pl.when(pl.program_id(2) == 0)
    def _():
        acc_ref[...] = jnp.zeros_like(acc_ref)

    acc_ref[...] += jnp.dot(x_ref[...], w_ref[...],
                            preferred_element_type=jnp.float32)

    @pl.when(pl.program_id(2) == pl.num_programs(2) - 1)
    def _():
        o_ref[...] = (acc_ref[...]
                      + b_ref[...].astype(jnp.float32)).astype(o_ref.dtype)


def linear(x, w_t, b, *, tm=256, tn=256, tk=512):
    """y = x @ w_t + b.   x: [M, K], w_t: [K, N], b: [N]  ->  [M, N] (x.dtype)."""
    M, K = x.shape
    N = w_t.shape[1]
    tm = M if M <= tm else tm                 # multiple of 8 when tiled
    tn = N if N <= tn else tn                 # multiple of 128 when tiled
    # K is the reduction axis: a padded partial K tile would pollute the
    # accumulator with garbage, so only tile K when it divides exactly.
    tk = tk if (K > tk and K % tk == 0) else K

    itemsize = x.dtype.itemsize
    cost = pl.CostEstimate(
        flops=2 * M * K * N,
        transcendentals=0,
        bytes_accessed=itemsize * (M * K + K * N + N + M * N))

    return pl.pallas_call(
        _linear_kernel,
        out_shape=jax.ShapeDtypeStruct((M, N), x.dtype),
        grid=(pl.cdiv(M, tm), pl.cdiv(N, tn), pl.cdiv(K, tk)),
        in_specs=[
            pl.BlockSpec((tm, tk), lambda i, j, k: (i, k)),
            pl.BlockSpec((tk, tn), lambda i, j, k: (k, j)),
            pl.BlockSpec((1, tn), lambda i, j, k: (0, j)),
        ],
        out_specs=pl.BlockSpec((tm, tn), lambda i, j, k: (i, j)),
        scratch_shapes=[pltpu.VMEM((tm, tn), jnp.float32)],
        compiler_params=pltpu.CompilerParams(
            dimension_semantics=("parallel", "parallel", "arbitrary"),
            vmem_limit_bytes=64 * 1024 * 1024),
        cost_estimate=cost,
    )(x, w_t, b.reshape(1, N))


# ----------------------------------------------------------------------------
# Attention core: grid (B, query_tiles), both parallel. Each step processes
# every head of one (batch, query-tile) block:
#   scores + f32 softmax + PV per head, plus the head-mean weights in one shot.
# Inputs are read directly from the fused-QKV layout [T, B, 3, H, d] (the
# block's last two dims are full (H, d), so no XLA relayouts are needed).
# ----------------------------------------------------------------------------
def _attn_core_kernel(q_ref, k_ref, v_ref, bias_ref, o_ref, w_ref, *,
                      scaling, inv_heads):
    # q_ref: [Tq, H, d]; k_ref/v_ref: [T, H, d]; bias_ref: [H, Tq, T]
    # o_ref: [Tq, H, d]; w_ref: [Tq, T]
    q = jnp.transpose(q_ref[...], (1, 0, 2)) * scaling      # [H, Tq, d]
    k = jnp.transpose(k_ref[...], (1, 0, 2))                 # [H, T,  d]
    v = jnp.transpose(v_ref[...], (1, 0, 2))                 # [H, T,  d]

    # scores = q @ k^T + attn_bias   (batched over heads, f32 accumulation)
    s = jnp.einsum("hqd,hkd->hqk", q, k,
                   preferred_element_type=jnp.float32)
    s = s + bias_ref[...].astype(jnp.float32)                # [H, Tq, T]

    # numerically-stable softmax over keys, in float32 (fairseq softmax dtype);
    # dropout is identity at inference.
    s = s - jnp.max(s, axis=-1, keepdims=True)
    e = jnp.exp(s)
    denom = jnp.sum(e, axis=-1, keepdims=True)
    # exact reciprocal keeps strict parity with the f32 reference softmax
    # (approx=True would use the EUP fast path but loosens parity).
    p = e * pl.reciprocal(denom, approx=False)               # [H, Tq, T]

    # per-head attention output  ->  natural [Tq, H, d] store layout
    o = jnp.einsum("hqk,hkd->hqd", p.astype(v.dtype), v,
                   preferred_element_type=jnp.float32)       # [H, Tq, d]
    o_ref[...] = jnp.transpose(o, (1, 0, 2)).astype(o_ref.dtype)

    # head-averaged attention weights (need_weights=True path)
    w_ref[...] = (jnp.sum(p, axis=0) * inv_heads).astype(w_ref.dtype)


def attention_core(qkv5, attn_bias, *, scaling, q_tile=128):
    """qkv5: [T, B, 3, H, d]; attn_bias: [B, H, T, T].

    Returns (attn_out [T, B, H, d], head_mean_weights [B, T, T])."""
    T, B, _, H, d = qkv5.shape
    Tq = T if T <= q_tile else q_tile
    num_q = pl.cdiv(T, Tq)

    kernel = functools.partial(_attn_core_kernel,
                               scaling=scaling, inv_heads=1.0 / H)

    itemsize = qkv5.dtype.itemsize
    cost = pl.CostEstimate(
        flops=4 * B * H * T * T * d + 5 * B * H * T * T,
        transcendentals=B * H * T * T,
        bytes_accessed=(itemsize * (B * T * H * d * (1 + 2 * num_q)
                                    + B * H * T * T + B * T * H * d)
                        + 4 * B * T * T))

    return pl.pallas_call(
        kernel,
        out_shape=(
            jax.ShapeDtypeStruct((T, B, H, d), qkv5.dtype),   # per-head attn
            jax.ShapeDtypeStruct((B, T, T), jnp.float32),     # head-mean wts
        ),
        grid=(B, num_q),
        in_specs=[
            # q / k / v straight out of the fused-QKV layout [T, B, 3, H, d].
            pl.BlockSpec((Tq, None, None, H, d), lambda b, qi: (qi, b, 0, 0, 0)),
            pl.BlockSpec((T, None, None, H, d), lambda b, qi: (0, b, 1, 0, 0)),
            pl.BlockSpec((T, None, None, H, d), lambda b, qi: (0, b, 2, 0, 0)),
            pl.BlockSpec((None, H, Tq, T), lambda b, qi: (b, 0, qi, 0)),
        ],
        out_specs=(
            pl.BlockSpec((Tq, None, H, d), lambda b, qi: (qi, b, 0, 0)),
            pl.BlockSpec((None, Tq, T), lambda b, qi: (b, qi, 0)),
        ),
        compiler_params=pltpu.CompilerParams(
            dimension_semantics=("parallel", "parallel"),
            vmem_limit_bytes=64 * 1024 * 1024),
        cost_estimate=cost,
    )(qkv5, qkv5, qkv5, attn_bias)


# ----------------------------------------------------------------------------
# Full forward pass (matches MultiheadAttention.forward for this config).
# ----------------------------------------------------------------------------
def prepare_params(params):
    """One-time fused-weight prep (hoisted out of the per-call forward path)."""
    Wq, bq = params["q_proj"]
    Wk, bk = params["k_proj"]
    Wv, bv = params["v_proj"]
    Wo, bo = params["out_proj"]
    wqkv_t = jnp.concatenate([Wq.T, Wk.T, Wv.T], axis=1)     # [E, 3E]
    bqkv = jnp.concatenate([bq, bk, bv])                     # [3E]
    return wqkv_t, bqkv, Wo.T, bo


def multihead_attention_forward(query, prepared, attn_bias, *, num_heads,
                                q_tile=128):
    """query: [T, B, E]; attn_bias: [B, H, T, T]. Returns (attn, attn_weights)."""
    T, B, E = query.shape
    H = num_heads
    d = E // H
    scaling = d ** -0.5
    wqkv_t, bqkv, wo_t, bo = prepared

    # Fused QKV projection: one lane-dense [T*B, 3E] matmul.
    x2d = query.reshape(T * B, E)
    qkv = linear(x2d, wqkv_t, bqkv)                          # [T*B, 3E]

    # Free reshape into the layout the attention kernel reads directly
    # (no HBM relayouts between the kernels).
    qkv5 = qkv.reshape(T, B, 3, H, d)

    attn_o, attn_w = attention_core(qkv5, attn_bias, scaling=scaling,
                                    q_tile=q_tile)

    # [T, B, H, d] -> [T*B, E] is a free reshape; out_proj; back to [T, B, E].
    attn = linear(attn_o.reshape(T * B, E), wo_t, bo).reshape(T, B, E)
    return attn, attn_w


# ----------------------------------------------------------------------------
# Pure-JAX reference of the exact PyTorch semantics (for the parity check).
# ----------------------------------------------------------------------------
def mha_reference(query, params, attn_bias, *, num_heads):
    T, B, E = query.shape
    H = num_heads
    d = E // H
    scaling = d ** -0.5
    Wq, bq = params["q_proj"]
    Wk, bk = params["k_proj"]
    Wv, bv = params["v_proj"]
    Wo, bo = params["out_proj"]

    q = (query @ Wq.T + bq) * scaling
    k = query @ Wk.T + bk
    v = query @ Wv.T + bv
    q = q.reshape(T, B * H, d).transpose(1, 0, 2)            # [B*H, T, d]
    k = k.reshape(T, B * H, d).transpose(1, 0, 2)
    v = v.reshape(T, B * H, d).transpose(1, 0, 2)

    aw = jnp.einsum("btd,bsd->bts", q, k) + attn_bias.reshape(B * H, T, T)
    awf = jax.nn.softmax(aw.astype(jnp.float32), axis=-1)
    attn = jnp.einsum("bts,bsd->btd", awf, v)                # [B*H, T, d]
    attn = attn.transpose(1, 0, 2).reshape(T, B, E)
    attn = attn @ Wo.T + bo
    aw_mean = awf.reshape(B, H, T, T).mean(axis=1)           # [B, T, T]
    return attn, aw_mean


if __name__ == "__main__":
    # Small shapes consistent with the module: seq=8, batch=2, embed=32, heads=4.
    T, B = 8, 2
    embed_dim, num_heads = 32, 4

    key = jax.random.PRNGKey(0)
    keys = jax.random.split(key, 10)

    def xavier(k, shape, gain=1.0):
        fan_out, fan_in = shape
        limit = gain * (6.0 / (fan_in + fan_out)) ** 0.5
        return jax.random.uniform(k, shape, jnp.float32, -limit, limit)

    g = 1.0 / (2.0 ** 0.5)   # reset_parameters: xavier with gain 1/sqrt(2)
    params = {
        "q_proj": (xavier(keys[0], (embed_dim, embed_dim), g),
                   0.02 * jax.random.normal(keys[1], (embed_dim,), jnp.float32)),
        "k_proj": (xavier(keys[2], (embed_dim, embed_dim), g),
                   0.02 * jax.random.normal(keys[3], (embed_dim,), jnp.float32)),
        "v_proj": (xavier(keys[4], (embed_dim, embed_dim), g),
                   0.02 * jax.random.normal(keys[5], (embed_dim,), jnp.float32)),
        "out_proj": (xavier(keys[6], (embed_dim, embed_dim), 1.0),
                     jnp.zeros((embed_dim,), jnp.float32)),
    }

    query = jax.random.normal(keys[7], (T, B, embed_dim), jnp.float32)
    attn_bias = jax.random.normal(keys[8], (B, num_heads, T, T), jnp.float32)

    prepared = prepare_params(params)   # hoisted: done once, not per call

    fwd = jax.jit(functools.partial(multihead_attention_forward,
                                    num_heads=num_heads))
    attn, attn_w = fwd(query, prepared, attn_bias)
    attn = jax.block_until_ready(attn)
    attn_w = jax.block_until_ready(attn_w)

    # Reference with full-f32 matmul precision for the parity check.
    with jax.default_matmul_precision("highest"):
        ref_attn, ref_w = mha_reference(
            query, params, attn_bias, num_heads=num_heads)

    assert attn.shape == (T, B, embed_dim)
    assert attn_w.shape == (B, T, T)
    assert jnp.allclose(attn, ref_attn, atol=1e-4, rtol=1e-4)
    assert jnp.allclose(attn_w, ref_w, atol=1e-4, rtol=1e-4)

    print("KERNEL_OK")
</pallas_src>

<mosaic_0001>
module attributes {stable_mosaic.version = 11 : i64} {
  func.func @_linear_kernel(%arg0: i32, %arg1: i32, %arg2: i32, %arg3: memref<16x32xf32, #tpu.memory_space<vmem>>, %arg4: memref<32x96xf32, #tpu.memory_space<vmem>>, %arg5: memref<1x96xf32, #tpu.memory_space<vmem>>, %arg6: memref<16x96xf32, #tpu.memory_space<vmem>>, %arg7: memref<16x96xf32, #tpu.memory_space<vmem>>) attributes {dimension_semantics = [#tpu.dimension_semantics<parallel>, #tpu.dimension_semantics<parallel>, #tpu.dimension_semantics<arbitrary>], iteration_bounds = array<i64: 1, 1, 1>, scalar_prefetch = 0 : i64, scratch_operands = 1 : i64, tpu.core_type = #tpu.core_type<tc>, window_params = [{transform_indices = @transform_0, window_bounds = array<i64: 16, 32>}, {transform_indices = @transform_1, window_bounds = array<i64: 32, 96>}, {transform_indices = @transform_2, window_bounds = array<i64: 1, 96>}, {transform_indices = @transform_3, window_bounds = array<i64: 16, 96>}]} {
    %c0_i32 = arith.constant 0 : i32
    %0 = arith.cmpi eq, %arg2, %c0_i32 : i32
    %1 = arith.extui %0 : i1 to i32
    %c0_i32_0 = arith.constant 0 : i32
    %2 = arith.cmpi ne, %1, %c0_i32_0 : i32
    scf.if %2 {
      %cst_10 = arith.constant 0.000000e+00 : f32
      %12 = vector.broadcast %cst_10 : f32 to vector<16x96xf32>
      %c0_11 = arith.constant 0 : index
      %c0_12 = arith.constant 0 : index
      %13 = vector.load %arg7[%c0_11, %c0_12] : memref<16x96xf32, #tpu.memory_space<vmem>>, vector<16x96xf32>
      tpu.vector_store %arg7[%c0_11, %c0_12], %12 {strides = array<i32>} : memref<16x96xf32, #tpu.memory_space<vmem>>, vector<16x96xf32>,
    } else {
    }
    %c0 = arith.constant 0 : index
    %c0_1 = arith.constant 0 : index
    %3 = vector.load %arg7[%c0, %c0_1] : memref<16x96xf32, #tpu.memory_space<vmem>>, vector<16x96xf32>
    %c0_2 = arith.constant 0 : index
    %c0_3 = arith.constant 0 : index
    %4 = vector.load %arg3[%c0_2, %c0_3] : memref<16x32xf32, #tpu.memory_space<vmem>>, vector<16x32xf32>
    %c0_4 = arith.constant 0 : index
    %c0_5 = arith.constant 0 : index
    %5 = vector.load %arg4[%c0_4, %c0_5] : memref<32x96xf32, #tpu.memory_space<vmem>>, vector<32x96xf32>
    %cst = arith.constant dense<0.000000e+00> : vector<16x96xf32>
    %6 = tpu.matmul %4, %5, %cst {dimension_numbers = #tpu.dot_dimension_numbers<[1], [0], [0], [1], [0, 0, 1, 1], [], []>} : vector<16x32xf32>, vector<32x96xf32>, vector<16x96xf32> -> vector<16x96xf32>
    %7 = arith.addf %3, %6 : vector<16x96xf32>
    %c0_6 = arith.constant 0 : index
    %c0_7 = arith.constant 0 : index
    %8 = vector.load %arg7[%c0_6, %c0_7] : memref<16x96xf32, #tpu.memory_space<vmem>>, vector<16x96xf32>
    tpu.vector_store %arg7[%c0_6, %c0_7], %7 {strides = array<i32>} : memref<16x96xf32, #tpu.memory_space<vmem>>, vector<16x96xf32>,
    %c0_i32_8 = arith.constant 0 : i32
    %9 = arith.cmpi eq, %arg2, %c0_i32_8 : i32
    %10 = arith.extui %9 : i1 to i32
    %c0_i32_9 = arith.constant 0 : i32
    %11 = arith.cmpi ne, %10, %c0_i32_9 : i32
    scf.if %11 {
      %c0_10 = arith.constant 0 : index
      %c0_11 = arith.constant 0 : index
      %12 = vector.load %arg7[%c0_10, %c0_11] : memref<16x96xf32, #tpu.memory_space<vmem>>, vector<16x96xf32>
      %c0_12 = arith.constant 0 : index
      %c0_13 = arith.constant 0 : index
      %13 = vector.load %arg5[%c0_12, %c0_13] : memref<1x96xf32, #tpu.memory_space<vmem>>, vector<1x96xf32>
      %14 = vector.broadcast %13 : vector<1x96xf32> to vector<16x96xf32>
      %15 = arith.addf %12, %14 : vector<16x96xf32>
      %c0_14 = arith.constant 0 : index
      %c0_15 = arith.constant 0 : index
      %16 = vector.load %arg6[%c0_14, %c0_15] : memref<16x96xf32, #tpu.memory_space<vmem>>, vector<16x96xf32>
      tpu.vector_store %arg6[%c0_14, %c0_15], %15 {strides = array<i32>} : memref<16x96xf32, #tpu.memory_space<vmem>>, vector<16x96xf32>,
    } else {
    }
    return
  }
  func.func @transform_0(%arg0: i32, %arg1: i32, %arg2: i32) -> (i32, i32) {
    %c0_i32 = arith.constant 0 : i32
    return %arg0, %arg2 : i32, i32
  }
  func.func @transform_1(%arg0: i32, %arg1: i32, %arg2: i32) -> (i32, i32) {
    %c0_i32 = arith.constant 0 : i32
    return %arg2, %arg1 : i32, i32
  }
  func.func @transform_2(%arg0: i32, %arg1: i32, %arg2: i32) -> (i32, i32) {
    %c0_i32 = arith.constant 0 : i32
    %c0_i32_0 = arith.constant 0 : i32
    return %c0_i32, %arg1 : i32, i32
  }
  func.func @transform_3(%arg0: i32, %arg1: i32, %arg2: i32) -> (i32, i32) {
    %c0_i32 = arith.constant 0 : i32
    return %arg0, %arg1 : i32, i32
  }
}

module attributes {stable_mosaic.version = 11 : i64} {
  func.func @_attn_core_kernel(%arg0: i32, %arg1: i32, %arg2: memref<8x1x1x4x8xf32, #tpu.memory_space<vmem>>, %arg3: memref<8x1x1x4x8xf32, #tpu.memory_space<vmem>>, %arg4: memref<8x1x1x4x8xf32, #tpu.memory_space<vmem>>, %arg5: memref<1x4x8x8xf32, #tpu.memory_space<vmem>>, %arg6: memref<8x1x4x8xf32, #tpu.memory_space<vmem>>, %arg7: memref<1x8x8xf32, #tpu.memory_space<vmem>>) attributes {dimension_semantics = [#tpu.dimension_semantics<parallel>, #tpu.dimension_semantics<parallel>], iteration_bounds = array<i64: 2, 1>, scalar_prefetch = 0 : i64, scratch_operands = 0 : i64, tpu.core_type = #tpu.core_type<tc>, window_params = [{transform_indices = @transform_0, window_bounds = array<i64: 8, 1, 1, 4, 8>}, {transform_indices = @transform_1, window_bounds = array<i64: 8, 1, 1, 4, 8>}, {transform_indices = @transform_2, window_bounds = array<i64: 8, 1, 1, 4, 8>}, {transform_indices = @transform_3, window_bounds = array<i64: 1, 4, 8, 8>}, {transform_indices = @transform_4, window_bounds = array<i64: 8, 1, 4, 8>}, {transform_indices = @transform_5, window_bounds = array<i64: 1, 8, 8>}]} {
    %c0 = arith.constant 0 : index
    %c0_0 = arith.constant 0 : index
    %c0_1 = arith.constant 0 : index
    %c0_2 = arith.constant 0 : index
    %c0_3 = arith.constant 0 : index
    %0 = vector.load %arg2[%c0, %c0_0, %c0_1, %c0_2, %c0_3] : memref<8x1x1x4x8xf32, #tpu.memory_space<vmem>>, vector<8x1x1x4x8xf32>
    %1 = vector.shape_cast %0 : vector<8x1x1x4x8xf32> to vector<8x4x8xf32>
    %2 = tpu.transpose %1, [1, 0, 2] : vector<8x4x8xf32> -> vector<4x8x8xf32>
    %cst = arith.constant 0.353553385 : f32
    %3 = vector.broadcast %cst : f32 to vector<4x8x8xf32>
    %4 = arith.mulf %2, %3 : vector<4x8x8xf32>
    %c0_4 = arith.constant 0 : index
    %c0_5 = arith.constant 0 : index
    %c0_6 = arith.constant 0 : index
    %c0_7 = arith.constant 0 : index
    %c0_8 = arith.constant 0 : index
    %5 = vector.load %arg3[%c0_4, %c0_5, %c0_6, %c0_7, %c0_8] : memref<8x1x1x4x8xf32, #tpu.memory_space<vmem>>, vector<8x1x1x4x8xf32>
    %6 = vector.shape_cast %5 : vector<8x1x1x4x8xf32> to vector<8x4x8xf32>
    %7 = tpu.transpose %6, [1, 0, 2] : vector<8x4x8xf32> -> vector<4x8x8xf32>
    %c0_9 = arith.constant 0 : index
    %c0_10 = arith.constant 0 : index
    %c0_11 = arith.constant 0 : index
    %c0_12 = arith.constant 0 : index
    %c0_13 = arith.constant 0 : index
    %8 = vector.load %arg4[%c0_9, %c0_10, %c0_11, %c0_12, %c0_13] : memref<8x1x1x4x8xf32, #tpu.memory_space<vmem>>, vector<8x1x1x4x8xf32>
    %9 = vector.shape_cast %8 : vector<8x1x1x4x8xf32> to vector<8x4x8xf32>
    %10 = tpu.transpose %9, [1, 0, 2] : vector<8x4x8xf32> -> vector<4x8x8xf32>
    "tpu.trace_start"() <{level = 10 : i32, message = "hqd,hkd->hqk"}> : () -> ()
    %cst_14 = arith.constant dense<0.000000e+00> : vector<4x8x8xf32>
    %11 = tpu.matmul %4, %7, %cst_14 {dimension_numbers = #tpu.dot_dimension_numbers<[2], [2], [1], [1], [0, 0, 0, 1, 1, 1], [0], [0]>} : vector<4x8x8xf32>, vector<4x8x8xf32>, vector<4x8x8xf32> -> vector<4x8x8xf32>
    "tpu.trace_stop"() : () -> ()
    %c0_15 = arith.constant 0 : index
    %c0_16 = arith.constant 0 : index
    %c0_17 = arith.constant 0 : index
    %c0_18 = arith.constant 0 : index
    %12 = vector.load %arg5[%c0_15, %c0_16, %c0_17, %c0_18] : memref<1x4x8x8xf32, #tpu.memory_space<vmem>>, vector<1x4x8x8xf32>
    %13 = vector.shape_cast %12 : vector<1x4x8x8xf32> to vector<4x8x8xf32>
    %14 = arith.addf %11, %13 : vector<4x8x8xf32>
    %cst_19 = arith.constant dense<0xFF800000> : vector<4x8xf32>
    %15 = vector.multi_reduction <maximumf>, %14, %cst_19 [2] : vector<4x8x8xf32> to vector<4x8xf32>
    %16 = vector.shape_cast %15 : vector<4x8xf32> to vector<4x8x1xf32>
    %17 = vector.broadcast %16 : vector<4x8x1xf32> to vector<4x8x8xf32>
    %18 = arith.subf %14, %17 : vector<4x8x8xf32>
    %19 = math.exp %18 : vector<4x8x8xf32>
    %cst_20 = arith.constant dense<0.000000e+00> : vector<4x8xf32>
    %20 = vector.multi_reduction <add>, %19, %cst_20 [2] : vector<4x8x8xf32> to vector<4x8xf32>
    %21 = vector.shape_cast %20 : vector<4x8xf32> to vector<4x8x1xf32>
    %22 = tpu.reciprocal %21 : vector<4x8x1xf32> -> vector<4x8x1xf32>
    %23 = vector.broadcast %22 : vector<4x8x1xf32> to vector<4x8x8xf32>
    %24 = arith.mulf %19, %23 : vector<4x8x8xf32>
    "tpu.trace_start"() <{level = 10 : i32, message = "hqk,hkd->hqd"}> : () -> ()
    %cst_21 = arith.constant dense<0.000000e+00> : vector<4x8x8xf32>
    %25 = tpu.matmul %24, %10, %cst_21 {dimension_numbers = #tpu.dot_dimension_numbers<[2], [1], [1], [2], [0, 0, 0, 1, 1, 2], [0], [0]>} : vector<4x8x8xf32>, vector<4x8x8xf32>, vector<4x8x8xf32> -> vector<4x8x8xf32>
    "tpu.trace_stop"() : () -> ()
    %26 = tpu.transpose %25, [1, 0, 2] : vector<4x8x8xf32> -> vector<8x4x8xf32>
    %c0_22 = arith.constant 0 : index
    %c0_23 = arith.constant 0 : index
    %c0_24 = arith.constant 0 : index
    %c0_25 = arith.constant 0 : index
    %27 = vector.load %arg6[%c0_22, %c0_23, %c0_24, %c0_25] : memref<8x1x4x8xf32, #tpu.memory_space<vmem>>, vector<8x1x4x8xf32>
    %28 = vector.shape_cast %27 : vector<8x1x4x8xf32> to vector<8x4x8xf32>
    %29 = vector.shape_cast %26 : vector<8x4x8xf32> to vector<8x1x4x8xf32>
    tpu.vector_store %arg6[%c0_22, %c0_23, %c0_24, %c0_25], %29 {strides = array<i32>} : memref<8x1x4x8xf32, #tpu.memory_space<vmem>>, vector<8x1x4x8xf32>,
    %cst_26 = arith.constant dense<0.000000e+00> : vector<8x8xf32>
    %30 = vector.multi_reduction <add>, %24, %cst_26 [0] : vector<4x8x8xf32> to vector<8x8xf32>
    %cst_27 = arith.constant 2.500000e-01 : f32
    %31 = vector.broadcast %cst_27 : f32 to vector<8x8xf32>
    %32 = arith.mulf %30, %31 : vector<8x8xf32>
    %c0_28 = arith.constant 0 : index
    %c0_29 = arith.constant 0 : index
    %c0_30 = arith.constant 0 : index
    %33 = vector.load %arg7[%c0_28, %c0_29, %c0_30] : memref<1x8x8xf32, #tpu.memory_space<vmem>>, vector<1x8x8xf32>
    %34 = vector.shape_cast %33 : vector<1x8x8xf32> to vector<8x8xf32>
    %35 = vector.shape_cast %32 : vector<8x8xf32> to vector<1x8x8xf32>
    tpu.vector_store %arg7[%c0_28, %c0_29, %c0_30], %35 {strides = array<i32>} : memref<1x8x8xf32, #tpu.memory_space<vmem>>, vector<1x8x8xf32>,
    return
  }
  func.func @transform_0(%arg0: i32, %arg1: i32) -> (i32, i32, i32, i32, i32) {
    %c0_i32 = arith.constant 0 : i32
    %c0_i32_0 = arith.constant 0 : i32
    %c0_i32_1 = arith.constant 0 : i32
    %c0_i32_2 = arith.constant 0 : i32
    return %arg1, %arg0, %c0_i32, %c0_i32_0, %c0_i32_1 : i32, i32, i32, i32, i32
  }
  func.func @transform_1(%arg0: i32, %arg1: i32) -> (i32, i32, i32, i32, i32) {
    %c0_i32 = arith.constant 0 : i32
    %c1_i32 = arith.constant 1 : i32
    %c0_i32_0 = arith.constant 0 : i32
    %c0_i32_1 = arith.constant 0 : i32
    %c0_i32_2 = arith.constant 0 : i32
    return %c0_i32, %arg0, %c1_i32, %c0_i32_0, %c0_i32_1 : i32, i32, i32, i32, i32
  }
  func.func @transform_2(%arg0: i32, %arg1: i32) -> (i32, i32, i32, i32, i32) {
    %c0_i32 = arith.constant 0 : i32
    %c2_i32 = arith.constant 2 : i32
    %c0_i32_0 = arith.constant 0 : i32
    %c0_i32_1 = arith.constant 0 : i32
    %c0_i32_2 = arith.constant 0 : i32
    return %c0_i32, %arg0, %c2_i32, %c0_i32_0, %c0_i32_1 : i32, i32, i32, i32, i32
  }
  func.func @transform_3(%arg0: i32, %arg1: i32) -> (i32, i32, i32, i32) {
    %c0_i32 = arith.constant 0 : i32
    %c0_i32_0 = arith.constant 0 : i32
    %c0_i32_1 = arith.constant 0 : i32
    return %arg0, %c0_i32, %arg1, %c0_i32_0 : i32, i32, i32, i32
  }
  func.func @transform_4(%arg0: i32, %arg1: i32) -> (i32, i32, i32, i32) {
    %c0_i32 = arith.constant 0 : i32
    %c0_i32_0 = arith.constant 0 : i32
    %c0_i32_1 = arith.constant 0 : i32
    return %arg1, %arg0, %c0_i32, %c0_i32_0 : i32, i32, i32, i32
  }
  func.func @transform_5(%arg0: i32, %arg1: i32) -> (i32, i32, i32) {
    %c0_i32 = arith.constant 0 : i32
    %c0_i32_0 = arith.constant 0 : i32
    return %arg0, %arg1, %c0_i32 : i32, i32, i32
  }
}

module attributes {stable_mosaic.version = 11 : i64} {
  func.func @_linear_kernel(%arg0: i32, %arg1: i32, %arg2: i32, %arg3: memref<16x32xf32, #tpu.memory_space<vmem>>, %arg4: memref<32x32xf32, #tpu.memory_space<vmem>>, %arg5: memref<1x32xf32, #tpu.memory_space<vmem>>, %arg6: memref<16x32xf32, #tpu.memory_space<vmem>>, %arg7: memref<16x32xf32, #tpu.memory_space<vmem>>) attributes {dimension_semantics = [#tpu.dimension_semantics<parallel>, #tpu.dimension_semantics<parallel>, #tpu.dimension_semantics<arbitrary>], iteration_bounds = array<i64: 1, 1, 1>, scalar_prefetch = 0 : i64, scratch_operands = 1 : i64, tpu.core_type = #tpu.core_type<tc>, window_params = [{transform_indices = @transform_0, window_bounds = array<i64: 16, 32>}, {transform_indices = @transform_1, window_bounds = array<i64: 32, 32>}, {transform_indices = @transform_2, window_bounds = array<i64: 1, 32>}, {transform_indices = @transform_3, window_bounds = array<i64: 16, 32>}]} {
    %c0_i32 = arith.constant 0 : i32
    %0 = arith.cmpi eq, %arg2, %c0_i32 : i32
    %1 = arith.extui %0 : i1 to i32
    %c0_i32_0 = arith.constant 0 : i32
    %2 = arith.cmpi ne, %1, %c0_i32_0 : i32
    scf.if %2 {
      %cst_10 = arith.constant 0.000000e+00 : f32
      %12 = vector.broadcast %cst_10 : f32 to vector<16x32xf32>
      %c0_11 = arith.constant 0 : index
      %c0_12 = arith.constant 0 : index
      %13 = vector.load %arg7[%c0_11, %c0_12] : memref<16x32xf32, #tpu.memory_space<vmem>>, vector<16x32xf32>
      tpu.vector_store %arg7[%c0_11, %c0_12], %12 {strides = array<i32>} : memref<16x32xf32, #tpu.memory_space<vmem>>, vector<16x32xf32>,
    } else {
    }
    %c0 = arith.constant 0 : index
    %c0_1 = arith.constant 0 : index
    %3 = vector.load %arg7[%c0, %c0_1] : memref<16x32xf32, #tpu.memory_space<vmem>>, vector<16x32xf32>
    %c0_2 = arith.constant 0 : index
    %c0_3 = arith.constant 0 : index
    %4 = vector.load %arg3[%c0_2, %c0_3] : memref<16x32xf32, #tpu.memory_space<vmem>>, vector<16x32xf32>
    %c0_4 = arith.constant 0 : index
    %c0_5 = arith.constant 0 : index
    %5 = vector.load %arg4[%c0_4, %c0_5] : memref<32x32xf32, #tpu.memory_space<vmem>>, vector<32x32xf32>
    %cst = arith.constant dense<0.000000e+00> : vector<16x32xf32>
    %6 = tpu.matmul %4, %5, %cst {dimension_numbers = #tpu.dot_dimension_numbers<[1], [0], [0], [1], [0, 0, 1, 1], [], []>} : vector<16x32xf32>, vector<32x32xf32>, vector<16x32xf32> -> vector<16x32xf32>
    %7 = arith.addf %3, %6 : vector<16x32xf32>
    %c0_6 = arith.constant 0 : index
    %c0_7 = arith.constant 0 : index
    %8 = vector.load %arg7[%c0_6, %c0_7] : memref<16x32xf32, #tpu.memory_space<vmem>>, vector<16x32xf32>
    tpu.vector_store %arg7[%c0_6, %c0_7], %7 {strides = array<i32>} : memref<16x32xf32, #tpu.memory_space<vmem>>, vector<16x32xf32>,
    %c0_i32_8 = arith.constant 0 : i32
    %9 = arith.cmpi eq, %arg2, %c0_i32_8 : i32
    %10 = arith.extui %9 : i1 to i32
    %c0_i32_9 = arith.constant 0 : i32
    %11 = arith.cmpi ne, %10, %c0_i32_9 : i32
    scf.if %11 {
      %c0_10 = arith.constant 0 : index
      %c0_11 = arith.constant 0 : index
      %12 = vector.load %arg7[%c0_10, %c0_11] : memref<16x32xf32, #tpu.memory_space<vmem>>, vector<16x32xf32>
      %c0_12 = arith.constant 0 : index
      %c0_13 = arith.constant 0 : index
      %13 = vector.load %arg5[%c0_12, %c0_13] : memref<1x32xf32, #tpu.memory_space<vmem>>, vector<1x32xf32>
      %14 = vector.broadcast %13 : vector<1x32xf32> to vector<16x32xf32>
      %15 = arith.addf %12, %14 : vector<16x32xf32>
      %c0_14 = arith.constant 0 : index
      %c0_15 = arith.constant 0 : index
      %16 = vector.load %arg6[%c0_14, %c0_15] : memref<16x32xf32, #tpu.memory_space<vmem>>, vector<16x32xf32>
      tpu.vector_store %arg6[%c0_14, %c0_15], %15 {strides = array<i32>} : memref<16x32xf32, #tpu.memory_space<vmem>>, vector<16x32xf32>,
    } else {
    }
    return
  }
  func.func @transform_0(%arg0: i32, %arg1: i32, %arg2: i32) -> (i32, i32) {
    %c0_i32 = arith.constant 0 : i32
    return %arg0, %arg2 : i32, i32
  }
  func.func @transform_1(%arg0: i32, %arg1: i32, %arg2: i32) -> (i32, i32) {
    %c0_i32 = arith.constant 0 : i32
    return %arg2, %arg1 : i32, i32
  }
  func.func @transform_2(%arg0: i32, %arg1: i32, %arg2: i32) -> (i32, i32) {
    %c0_i32 = arith.constant 0 : i32
    %c0_i32_0 = arith.constant 0 : i32
    return %c0_i32, %arg1 : i32, i32
  }
  func.func @transform_3(%arg0: i32, %arg1: i32, %arg2: i32) -> (i32, i32) {
    %c0_i32 = arith.constant 0 : i32
    return %arg0, %arg1 : i32, i32
  }
}

</mosaic_0001>

<llo_original>
// kernel: multihead_attention_forward.3
$region0: #{multihead_attention_forward.3}
  #allocation0 [shape = 'u32[]', space=smem, size = 0x4, offset = 0x4, fixed_abs, tag = 'smem constant byte address 0x4 - core index']
  #allocation1 [shape = 'u32[72,128]{1,0:T(1,128)}', space=vmem, size = 0x9000, scoped, tag = 'internal scratch']
  #allocation2 [shape = 'f32[16,96]{1,0:T(8,128)}', space=vmem, size = 0x2000, scoped, tag = 'scratch operand']
  %s0 = inlined_call_operand.hbm [shape: f32[16,32], index: 0, kind: input, shape index: {}]
  %s1 = inlined_call_operand.hbm [shape: f32[32,96], index: 1, kind: input, shape index: {}]
  %s2 = inlined_call_operand.vmem [shape: f32[1,96], index: 2, kind: input, shape index: {}]
  %s3 = inlined_call_operand.vmem [shape: f32[16,96], index: 3, kind: output, shape index: {}]
  %s4 = sld [smem:[#allocation0]]
  $region38: #{multihead_attention_forward.3} parent=0
    _
  %s6 = ssub.s32 1, %s4
  %s7 = scalar_select 0, %s6, %s4
  $region1: #{multihead_attention_forward.3} parent=0
    #allocation3 [shape = 'u8[8192]{0}', space=vmem, size = 0x2000, scoped, tag = 'input window, operand 0, single buffered']
    #allocation4 [shape = 's32[1]{0}', space=sflag, size = 0x4, scoped, tag = 'scoped memory for multihead_attention_forward.3']
    #allocation5 [shape = 'u8[16384]{0}', space=vmem, size = 0x4000, scoped, tag = 'input window, operand 1, single buffered']
    #allocation6 [shape = 's32[1]{0}', space=sflag, size = 0x4, scoped, tag = 'scoped memory for multihead_attention_forward.3']
    %8 = vsyncpa [#allocation4], 0
    %9 = vsyncpa [#allocation6], 0
    // Predicated region
    $region2: #{multihead_attention_forward.3} parent=1 // pred_check
      _
    $region3: #{multihead_attention_forward.3} parent=1 // pred_check_branch
      %11 = sbr.rel (0) target = $region5
    $region4: #{multihead_attention_forward.3} parent=1 // pred_region
      %13 = vsyncadd [#allocation4], 0
      %s14 = sshll.u32 %s0, 4
      %s15 = int_to_ptr.hbm [resolvable:$true] %s14
      %s16 = sshll.u32 [#allocation3], 4
      %s17 = int_to_ptr.vmem [resolvable:$true] %s16
      %22 = dma.hbm_to_vmem [thread:$0]  %s15, 256, %s17, [#allocation4], 128, 128, 8
    $region5: #{multihead_attention_forward.3} parent=1 // pred_fallthru
      _
    // Predicated region
    $region6: #{multihead_attention_forward.3} parent=1 // pred_check
      _
    $region7: #{multihead_attention_forward.3} parent=1 // pred_check_branch
      %24 = sbr.rel (0) target = $region9
    $region8: #{multihead_attention_forward.3} parent=1 // pred_region
      %26 = vsyncadd [#allocation6], 0
      %s27 = sshll.u32 %s1, 4
      %s28 = int_to_ptr.hbm [resolvable:$true] %s27
      %s29 = sshll.u32 [#allocation5], 4
      %s30 = int_to_ptr.vmem [resolvable:$true] %s29
      %35 = dma.hbm_to_vmem [thread:$0]  %s28, 512, %s30, [#allocation6], 128, 128, 8
    $region9: #{multihead_attention_forward.3} parent=1 // pred_fallthru
      _
    // Predicated region
    $region10: #{multihead_attention_forward.3} parent=1 // pred_check
      _
    $region11: #{multihead_attention_forward.3} parent=1 // pred_check_branch
      %37 = sbr.rel (0) target = $region13
    $region12: #{multihead_attention_forward.3} parent=1 // pred_region
      _
    $region13: #{multihead_attention_forward.3} parent=1 // pred_fallthru
      _
    // Predicated region
    $region14: #{multihead_attention_forward.3} parent=1 // pred_check
      _
    $region15: #{multihead_attention_forward.3} parent=1 // pred_check_branch
      %39 = sbr.rel (0) target = $region17
    $region16: #{multihead_attention_forward.3} parent=1 // pred_region
      %41 = dma.done [#allocation4], 256
    $region17: #{multihead_attention_forward.3} parent=1 // pred_fallthru
      _
    // Predicated region
    $region18: #{multihead_attention_forward.3} parent=1 // pred_check
      _
    $region19: #{multihead_attention_forward.3} parent=1 // pred_check_branch
      %43 = sbr.rel (0) target = $region21
    $region20: #{multihead_attention_forward.3} parent=1 // pred_region
      %45 = dma.done [#allocation6], 512
    $region21: #{multihead_attention_forward.3} parent=1 // pred_fallthru
      _
    %p46 = scmp.eq.s32.totalorder 0, 0
    // Predicated region
    $region22: #{multihead_attention_forward.3} parent=1 // pred_check
      %p47 = pneg %p46
    $region23: #{multihead_attention_forward.3} parent=1 // pred_check_branch
      %49 = sbr.rel (%p47) target = $region25
    $region24: #{multihead_attention_forward.3} parent=1 // pred_region
      %vm50 = vcmask 785408
      %51 = vst.msk [vmem:[#allocation2] sm:$0xff] %vm50, 0.0
      %52 = vst.msk [vmem:[#allocation2 + $0x8] sm:$0xff] %vm50, 0.0
    $region25: #{multihead_attention_forward.3} parent=1 // pred_fallthru
      _
    %v53 = vld [vmem:[#allocation2] sm:$0xff]
    %v54 = vld [vmem:[#allocation2 + $0x8] sm:$0xff]
    %v55 = vld [vmem:[#allocation3] sm:$0xff]
    %v56 = vld [vmem:[#allocation3 + $0x8] sm:$0xff]
    %v57 = vld [vmem:[#allocation5] sm:$0xff]
    %v58 = vld [vmem:[#allocation5 + $0x8] sm:$0xff]
    %v59 = vld [vmem:[#allocation5 + $0x10] sm:$0xff]
    %v60 = vld [vmem:[#allocation5 + $0x18] sm:$0xff]
    %vm61 = vcmask 261120
    %v63 = vsel %vm61, %v55, 0
    %v66 = vsel %vm61, %v56, 0
    %68 = vmatpush.msra.mxu0 0.0
    %69 = vmatpush.msra.mxu0 0.0
    %70 = vmatpush.msra.mxu0 0.0
    %71 = vmatpush.msra.mxu0 0.0
    %72 = vmatpush.msra.mxu0 0.0
    %73 = vmatpush.msra.mxu0 0.0
    %74 = vmatpush.msra.mxu0 0.0
    %75 = vmatpush.msra.mxu0 0.0
    %76 = vmatpush.msra.mxu0 0.0
    %77 = vmatpush.msra.mxu0 0.0
    %78 = vmatpush.msra.mxu0 0.0
    %79 = vmatpush.msra.mxu0 0.0
    %80 = vmatpush.msra.mxu0 %v60
    %81 = vmatpush.msra.mxu0 %v59
    %82 = vmatpush.msra.mxu0 %v58
    %83 = vmatpush.msra.mxu0 %v57
    %84 = vmatmul.f32.gmra.mxu0 %v63
    %v85 = vpop.f32.mrf.mxu0
    %v86 = vadd.f32 0.0, %v85
    %87 = vmatmul.f32.gmra.mxu0 %v66
    %v88 = vpop.f32.mrf.mxu0
    %v89 = vadd.f32 0.0, %v88
    %90 = vdwg.mxu0
    %v91 = vadd.f32 %v53, %v86
    %v92 = vadd.f32 %v54, %v89
    %vm93 = vcmask 785408
    %94 = vst.msk [vmem:[#allocation2] sm:$0xff] %vm93, %v91
    %95 = vst.msk [vmem:[#allocation2 + $0x8] sm:$0xff] %vm93, %v92
    // Predicated region
    $region26: #{multihead_attention_forward.3} parent=1 // pred_check
      %p96 = pneg %p46
    $region27: #{multihead_attention_forward.3} parent=1 // pred_check_branch
      %98 = sbr.rel (%p96) target = $region29
    $region28: #{multihead_attention_forward.3} parent=1 // pred_region
      %v99 = vld [vmem:[#allocation2] sm:$0xff]
      %v100 = vld [vmem:[#allocation2 + $0x8] sm:$0xff]
      %v101 = vld [vmem:[%s2] sm:$0x1]
      %v103 = vperm.slane %v101, 0
      %v105 = vadd.f32 %v99, %v103
      %v106 = vadd.f32 %v100, %v103
      %107 = vst.msk [vmem:[%s3] sm:$0xff] %vm93, %v105
      %108 = vst.msk [vmem:[%s3 + $0x8] sm:$0xff] %vm93, %v106
    $region29: #{multihead_attention_forward.3} parent=1 // pred_fallthru
      _
    // Predicated region
    $region30: #{multihead_attention_forward.3} parent=1 // pred_check
      _
    $region31: #{multihead_attention_forward.3} parent=1 // pred_check_branch
      %110 = sbr.rel (0) target = $region33
    $region32: #{multihead_attention_forward.3} parent=1 // pred_region
      _
    $region33: #{multihead_attention_forward.3} parent=1 // pred_fallthru
      _
    // Predicated region
    $region34: #{multihead_attention_forward.3} parent=1 // pred_check
      _
    $region35: #{multihead_attention_forward.3} parent=1 // pred_check_branch
      %112 = sbr.rel (0) target = $region37
    $region36: #{multihead_attention_forward.3} parent=1 // pred_region
      _
    $region37: #{multihead_attention_forward.3} parent=1 // pred_fallthru
      _
    %113 = vsyncpa [#allocation4], 1
    %114 = vsyncpa [#allocation6], 1

// kernel: multihead_attention_forward.5
$region0: #{multihead_attention_forward.5}
  #allocation0 [shape = 'u32[]', space=smem, size = 0x4, offset = 0x4, fixed_abs, tag = 'smem constant byte address 0x4 - core index']
  #allocation1 [shape = 'u32[72,128]{1,0:T(1,128)}', space=vmem, size = 0x9000, scoped, tag = 'internal scratch']
  #allocation2 [shape = 'f32[16,32]{1,0:T(8,128)}', space=vmem, size = 0x2000, scoped, tag = 'scratch operand']
  %s0 = inlined_call_operand.vmem [shape: f32[16,32], index: 0, kind: input, shape index: {}]
  %s1 = inlined_call_operand.vmem [shape: f32[32,32], index: 1, kind: input, shape index: {}]
  %s2 = inlined_call_operand.vmem [shape: f32[1,32], index: 2, kind: input, shape index: {}]
  %s3 = inlined_call_operand.hbm [shape: f32[16,32], index: 3, kind: output, shape index: {}]
  %s4 = sld [smem:[#allocation0]]
  $region30: #{multihead_attention_forward.5} parent=0
    _
  %s6 = ssub.s32 1, %s4
  %s7 = scalar_select 0, %s6, %s4
  $region1: #{multihead_attention_forward.5} parent=0
    #allocation3 [shape = 'u8[8192]{0}', space=vmem, size = 0x2000, scoped, tag = 'output window, operand 0, single buffered']
    #allocation4 [shape = 's32[1]{0}', space=sflag, size = 0x4, scoped, tag = 'scoped memory for multihead_attention_forward.5']
    %8 = vsyncpa [#allocation4], 0
    // Predicated region
    $region2: #{multihead_attention_forward.5} parent=1 // pred_check
      _
    $region3: #{multihead_attention_forward.5} parent=1 // pred_check_branch
      %10 = sbr.rel (0) target = $region5
    $region4: #{multihead_attention_forward.5} parent=1 // pred_region
      _
    $region5: #{multihead_attention_forward.5} parent=1 // pred_fallthru
      _
    // Predicated region
    $region6: #{multihead_attention_forward.5} parent=1 // pred_check
      _
    $region7: #{multihead_attention_forward.5} parent=1 // pred_check_branch
      %12 = sbr.rel (0) target = $region9
    $region8: #{multihead_attention_forward.5} parent=1 // pred_region
      _
    $region9: #{multihead_attention_forward.5} parent=1 // pred_fallthru
      _
    // Predicated region
    $region10: #{multihead_attention_forward.5} parent=1 // pred_check
      _
    $region11: #{multihead_attention_forward.5} parent=1 // pred_check_branch
      %14 = sbr.rel (0) target = $region13
    $region12: #{multihead_attention_forward.5} parent=1 // pred_region
      _
    $region13: #{multihead_attention_forward.5} parent=1 // pred_fallthru
      _
    %p15 = scmp.eq.s32.totalorder 0, 0
    // Predicated region
    $region14: #{multihead_attention_forward.5} parent=1 // pred_check
      %p16 = pneg %p15
    $region15: #{multihead_attention_forward.5} parent=1 // pred_check_branch
      %18 = sbr.rel (%p16) target = $region17
    $region16: #{multihead_attention_forward.5} parent=1 // pred_region
      %vm19 = vcmask 261120
      %20 = vst.msk [vmem:[#allocation2] sm:$0xff] %vm19, 0.0
      %21 = vst.msk [vmem:[#allocation2 + $0x8] sm:$0xff] %vm19, 0.0
    $region17: #{multihead_attention_forward.5} parent=1 // pred_fallthru
      _
    %v22 = vld [vmem:[#allocation2] sm:$0xff]
    %v23 = vld [vmem:[#allocation2 + $0x8] sm:$0xff]
    %v24 = vld [vmem:[%s0] sm:$0xff]
    %v25 = vld [vmem:[%s0 + $0x8] sm:$0xff]
    %v26 = vld [vmem:[%s1] sm:$0xff]
    %v27 = vld [vmem:[%s1 + $0x8] sm:$0xff]
    %v28 = vld [vmem:[%s1 + $0x10] sm:$0xff]
    %v29 = vld [vmem:[%s1 + $0x18] sm:$0xff]
    %vm30 = vcmask 261120
    %v32 = vsel %vm30, %v24, 0
    %v35 = vsel %vm30, %v25, 0
    %37 = vmatpush.msra.mxu0 0.0
    %38 = vmatpush.msra.mxu0 0.0
    %39 = vmatpush.msra.mxu0 0.0
    %40 = vmatpush.msra.mxu0 0.0
    %41 = vmatpush.msra.mxu0 0.0
    %42 = vmatpush.msra.mxu0 0.0
    %43 = vmatpush.msra.mxu0 0.0
    %44 = vmatpush.msra.mxu0 0.0
    %45 = vmatpush.msra.mxu0 0.0
    %46 = vmatpush.msra.mxu0 0.0
    %47 = vmatpush.msra.mxu0 0.0
    %48 = vmatpush.msra.mxu0 0.0
    %49 = vmatpush.msra.mxu0 %v29
    %50 = vmatpush.msra.mxu0 %v28
    %51 = vmatpush.msra.mxu0 %v27
    %52 = vmatpush.msra.mxu0 %v26
    %53 = vmatmul.f32.gmra.mxu0 %v32
    %v54 = vpop.f32.mrf.mxu0
    %v55 = vadd.f32 0.0, %v54
    %56 = vmatmul.f32.gmra.mxu0 %v35
    %v57 = vpop.f32.mrf.mxu0
    %v58 = vadd.f32 0.0, %v57
    %59 = vdwg.mxu0
    %v60 = vadd.f32 %v22, %v55
    %v61 = vadd.f32 %v23, %v58
    %62 = vst.msk [vmem:[#allocation2] sm:$0xff] %vm30, %v60
    %63 = vst.msk [vmem:[#allocation2 + $0x8] sm:$0xff] %vm30, %v61
    // Predicated region
    $region18: #{multihead_attention_forward.5} parent=1 // pred_check
      %p64 = pneg %p15
    $region19: #{multihead_attention_forward.5} parent=1 // pred_check_branch
      %66 = sbr.rel (%p64) target = $region21
    $region20: #{multihead_attention_forward.5} parent=1 // pred_region
      %v67 = vld [vmem:[#allocation2] sm:$0xff]
      %v68 = vld [vmem:[#allocation2 + $0x8] sm:$0xff]
      %v69 = vld [vmem:[%s2] sm:$0x1]
      %v71 = vperm.slane %v69, 0
      %v73 = vadd.f32 %v67, %v71
      %v74 = vadd.f32 %v68, %v71
      %75 = vst.msk [vmem:[#allocation3] sm:$0xff] %vm30, %v73
      %76 = vst.msk [vmem:[#allocation3 + $0x8] sm:$0xff] %vm30, %v74
    $region21: #{multihead_attention_forward.5} parent=1 // pred_fallthru
      _
    // Predicated region
    $region22: #{multihead_attention_forward.5} parent=1 // pred_check
      _
    $region23: #{multihead_attention_forward.5} parent=1 // pred_check_branch
      %78 = sbr.rel (0) target = $region25
    $region24: #{multihead_attention_forward.5} parent=1 // pred_region
      %80 = vsyncadd [#allocation4], 0
      %s81 = sshll.u32 [#allocation3], 4
      %s82 = int_to_ptr.vmem [resolvable:$true] %s81
      %s83 = sshll.u32 %s3, 4
      %s84 = int_to_ptr.hbm [resolvable:$true] %s83
      %89 = dma.vmem_to_hbm [thread:$0]  %s82, 256, %s84, [#allocation4], 128, 128, 8
    $region25: #{multihead_attention_forward.5} parent=1 // pred_fallthru
      _
    // Predicated region
    $region26: #{multihead_attention_forward.5} parent=1 // pred_check
      _
    $region27: #{multihead_attention_forward.5} parent=1 // pred_check_branch
      %91 = sbr.rel (0) target = $region29
    $region28: #{multihead_attention_forward.5} parent=1 // pred_region
      %93 = dma.done [#allocation4], 256
    $region29: #{multihead_attention_forward.5} parent=1 // pred_fallthru
      _
    %94 = vsyncpa [#allocation4], 1

// kernel: multihead_attention_forward.4
$region0: #{multihead_attention_forward.4}
  #allocation0 [shape = 'u32[]', space=smem, size = 0x4, offset = 0x4, fixed_abs, tag = 'smem constant byte address 0x4 - core index']
  #allocation1 [shape = 'u32[72,128]{1,0:T(1,128)}', space=vmem, size = 0x9000, scoped, tag = 'internal scratch']
  %s0 = inlined_call_operand.vmem [shape: f32[8,2,3,4,8], index: 0, kind: input, shape index: {}, may-alias: {0,1,2}]
  %s1 = inlined_call_operand.vmem [shape: f32[8,2,3,4,8], index: 1, kind: input, shape index: {}, may-alias: {0,1,2}]
  %s2 = inlined_call_operand.vmem [shape: f32[8,2,3,4,8], index: 2, kind: input, shape index: {}, may-alias: {0,1,2}]
  %s3 = inlined_call_operand.vmem [shape: f32[2,4,8,8], index: 3, kind: input, shape index: {}]
  %s4 = inlined_call_operand.vmem [shape: f32[8,2,4,8], index: 4, kind: output, shape index: {0}]
  %s5 = inlined_call_operand.hbm [shape: f32[2,8,8], index: 5, kind: output, shape index: {1}]
  %6 = xla_tuple %s4, %s5
  %s7 = sld [smem:[#allocation0]]
  $region217: #{multihead_attention_forward.4} parent=0
    _
  %s9 = ssub.s32 1, %s7
  %s10 = scalar_select 0, %s9, %s7
  $region1: #{multihead_attention_forward.4} parent=0
    #allocation2 [shape = 'u8[32768]{0}', space=vmem, size = 0x8000, scoped, tag = 'input window, operand 0']
    #allocation3 [shape = 'u8[32768]{0}', space=vmem, size = 0x8000, scoped, tag = 'input window, operand 1']
    #allocation4 [shape = 'u8[32768]{0}', space=vmem, size = 0x8000, scoped, tag = 'input window, operand 2']
    #allocation5 [shape = 'u8[32768]{0}', space=vmem, size = 0x8000, scoped, tag = 'output window, operand 0']
    #allocation6 [shape = 'u8[8192]{0}', space=vmem, size = 0x2000, scoped, tag = 'output window, operand 1']
    #allocation7 [shape = 's32[2]{0}', space=sflag, size = 0x8, scoped, tag = 'scoped memory for multihead_attention_forward.4']
    %11 = vsyncpa [#allocation7], 0
    %s12 = scalar_lea.sflag [#allocation7], 1
    %13 = vsyncpa %s12, 0
    loop: start=0, step=1, limit=4
    $region2: #{multihead_attention_forward.4} parent=1 // loop_pre_header
      _
    $region3: #{multihead_attention_forward.4} parent=1 // loop_header
      %s15 = sphi 0, %s19
      %p16 = scmp.ge.s32.totalorder %s15, 4
      %s22 = sphi 0, %s34
      %s23 = sphi 0, %s30
      %s24 = sphi 0, %s22
      %s25 = sphi 0, %s23
      %s26 = sphi 0, %s24
      %s27 = sphi 0, %s25
      %s39 = sphi 0, %s41
      %s42 = sphi 0, %s39
      %s43 = sphi 0, %s42
      %s59 = sphi 0, %s43
      %s65 = sphi 0, %s67
      %s68 = sphi 0, %s65
      %s69 = sphi 0, %s68
      %s85 = sphi 0, %s69
      %s91 = sphi 0, %s93
      %s94 = sphi 0, %s91
      %s95 = sphi 0, %s94
      %s111 = sphi 0, %s95
      %s119 = sphi 0, %s121
      %s122 = sphi 0, %s119
      %s123 = sphi 0, %s122
      %s139 = sphi 0, %s123
      %s147 = sphi 0, %s149
      %s150 = sphi 0, %s147
      %s151 = sphi 0, %s150
      %s167 = sphi 0, %s151
      %s175 = sphi 0, %s177
      %s178 = sphi 0, %s175
      %s179 = sphi 0, %s178
      %s195 = sphi 0, %s179
    $region4: #{multihead_attention_forward.4} parent=1 // loop_header_branch
      %18 = sbr.rel (%p16) target = $region8
    $region5: #{multihead_attention_forward.4} parent=1 // loop_body
      %s20 = ssub.s32 %s15, 1
      %s21 = ssub.s32 %s15, 2
      %s28 = sadd.s32 1, %s23
      %p29 = scmp.ge.s32.totalorder %s28, 1
      %s30 = scalar_select %p29, 0, %s28
      %s31 = sadd.s32 1, %s22
      %s32 = scalar_select %p29, %s31, %s22
      %p33 = scmp.ge.s32.totalorder %s32, 2
      %s34 = scalar_select %p33, 0, %s32
      %s35 = ssub.s32 %s23, %s30
      %s36 = ssub.s32 %s22, %s34
      %s37 = sor.u32 %s35, %s36
      %p38 = scmp.eq.s32.totalorder %s37, 0
      %s40 = sadd.s32 %s39, 1
      %s41 = scalar_select %p38, %s39, %s40
      %p44 = pneg %p38
      %p45 = scmp.eq.s32.totalorder %s15, 1
      %p46 = por %p44, %p45
      %p47 = scmp.ne.s32.totalorder %s39, %s42
      %p48 = scmp.eq.s32.totalorder %s15, 0
      %p49 = por %p47, %p48
      %p50 = scmp.ne.s32.totalorder %s39, %s42
      %p51 = scmp.eq.s32.totalorder %s20, 1
      %p52 = por %p50, %p51
      %p53 = scmp.ne.s32.totalorder %s42, %s43
      %p54 = scmp.eq.s32.totalorder %s20, 0
      %p55 = por %p53, %p54
      %p56 = scmp.ne.s32.totalorder %s42, %s43
      %p57 = scmp.eq.s32.totalorder %s21, 1
      %p58 = por %p56, %p57
      %p60 = scmp.ne.s32.totalorder %s43, %s59
      %p61 = scmp.eq.s32.totalorder %s21, 0
      %p62 = por %p60, %p61
      %s63 = ssub.s32 %s22, %s34
      %p64 = scmp.eq.s32.totalorder %s63, 0
      %s66 = sadd.s32 %s65, 1
      %s67 = scalar_select %p64, %s65, %s66
      %p70 = pneg %p64
      %p71 = scmp.eq.s32.totalorder %s15, 1
      %p72 = por %p70, %p71
      %p73 = scmp.ne.s32.totalorder %s65, %s68
      %p74 = scmp.eq.s32.totalorder %s15, 0
      %p75 = por %p73, %p74
      %p76 = scmp.ne.s32.totalorder %s65, %s68
      %p77 = scmp.eq.s32.totalorder %s20, 1
      %p78 = por %p76, %p77
      %p79 = scmp.ne.s32.totalorder %s68, %s69
      %p80 = scmp.eq.s32.totalorder %s20, 0
      %p81 = por %p79, %p80
      %p82 = scmp.ne.s32.totalorder %s68, %s69
      %p83 = scmp.eq.s32.totalorder %s21, 1
      %p84 = por %p82, %p83
      %p86 = scmp.ne.s32.totalorder %s69, %s85
      %p87 = scmp.eq.s32.totalorder %s21, 0
      %p88 = por %p86, %p87
      %s89 = ssub.s32 %s22, %s34
      %p90 = scmp.eq.s32.totalorder %s89, 0
      %s92 = sadd.s32 %s91, 1
      %s93 = scalar_select %p90, %s91, %s92
      %p96 = pneg %p90
      %p97 = scmp.eq.s32.totalorder %s15, 1
      %p98 = por %p96, %p97
      %p99 = scmp.ne.s32.totalorder %s91, %s94
      %p100 = scmp.eq.s32.totalorder %s15, 0
      %p101 = por %p99, %p100
      %p102 = scmp.ne.s32.totalorder %s91, %s94
      %p103 = scmp.eq.s32.totalorder %s20, 1
      %p104 = por %p102, %p103
      %p105 = scmp.ne.s32.totalorder %s94, %s95
      %p106 = scmp.eq.s32.totalorder %s20, 0
      %p107 = por %p105, %p106
      %p108 = scmp.ne.s32.totalorder %s94, %s95
      %p109 = scmp.eq.s32.totalorder %s21, 1
      %p110 = por %p108, %p109
      %p112 = scmp.ne.s32.totalorder %s95, %s111
      %p113 = scmp.eq.s32.totalorder %s21, 0
      %p114 = por %p112, %p113
      %s115 = ssub.s32 %s22, %s34
      %s116 = ssub.s32 %s23, %s30
      %s117 = sor.u32 %s115, %s116
      %p118 = scmp.eq.s32.totalorder %s117, 0
      %s120 = sadd.s32 %s119, 1
      %s121 = scalar_select %p118, %s119, %s120
      %p124 = pneg %p118
      %p125 = scmp.eq.s32.totalorder %s15, 1
      %p126 = por %p124, %p125
      %p127 = scmp.ne.s32.totalorder %s119, %s122
      %p128 = scmp.eq.s32.totalorder %s15, 0
      %p129 = por %p127, %p128
      %p130 = scmp.ne.s32.totalorder %s119, %s122
      %p131 = scmp.eq.s32.totalorder %s20, 1
      %p132 = por %p130, %p131
      %p133 = scmp.ne.s32.totalorder %s122, %s123
      %p134 = scmp.eq.s32.totalorder %s20, 0
      %p135 = por %p133, %p134
      %p136 = scmp.ne.s32.totalorder %s122, %s123
      %p137 = scmp.eq.s32.totalorder %s21, 1
      %p138 = por %p136, %p137
      %p140 = scmp.ne.s32.totalorder %s123, %s139
      %p141 = scmp.eq.s32.totalorder %s21, 0
      %p142 = por %p140, %p141
      %s143 = ssub.s32 %s23, %s30
      %s144 = ssub.s32 %s22, %s34
      %s145 = sor.u32 %s143, %s144
      %p146 = scmp.eq.s32.totalorder %s145, 0
      %s148 = sadd.s32 %s147, 1
      %s149 = scalar_select %p146, %s147, %s148
      %p152 = pneg %p146
      %p153 = scmp.eq.s32.totalorder %s15, 1
      %p154 = por %p152, %p153
      %p155 = scmp.ne.s32.totalorder %s147, %s150
      %p156 = scmp.eq.s32.totalorder %s15, 0
      %p157 = por %p155, %p156
      %p158 = scmp.ne.s32.totalorder %s147, %s150
      %p159 = scmp.eq.s32.totalorder %s20, 1
      %p160 = por %p158, %p159
      %p161 = scmp.ne.s32.totalorder %s150, %s151
      %p162 = scmp.eq.s32.totalorder %s20, 0
      %p163 = por %p161, %p162
      %p164 = scmp.ne.s32.totalorder %s150, %s151
      %p165 = scmp.eq.s32.totalorder %s21, 1
      %p166 = por %p164, %p165
      %p168 = scmp.ne.s32.totalorder %s151, %s167
      %p169 = scmp.eq.s32.totalorder %s21, 0
      %p170 = por %p168, %p169
      %s171 = ssub.s32 %s22, %s34
      %s172 = ssub.s32 %s23, %s30
      %s173 = sor.u32 %s171, %s172
      %p174 = scmp.eq.s32.totalorder %s173, 0
      %s176 = sadd.s32 %s175, 1
      %s177 = scalar_select %p174, %s175, %s176
      %p180 = pneg %p174
      %p181 = scmp.eq.s32.totalorder %s15, 1
      %p182 = por %p180, %p181
      %p183 = scmp.ne.s32.totalorder %s175, %s178
      %p184 = scmp.eq.s32.totalorder %s15, 0
      %p185 = por %p183, %p184
      %p186 = scmp.ne.s32.totalorder %s175, %s178
      %p187 = scmp.eq.s32.totalorder %s20, 1
      %p188 = por %p186, %p187
      %p189 = scmp.ne.s32.totalorder %s178, %s179
      %p190 = scmp.eq.s32.totalorder %s20, 0
      %p191 = por %p189, %p190
      %p192 = scmp.ne.s32.totalorder %s178, %s179
      %p193 = scmp.eq.s32.totalorder %s21, 1
      %p194 = por %p192, %p193
      %p196 = scmp.ne.s32.totalorder %s179, %s195
      %p197 = scmp.eq.s32.totalorder %s21, 0
      %p198 = por %p196, %p197
      %p199 = scmp.le.s32.totalorder 1, %s15
      %p200 = scmp.lt.s32.totalorder %s15, 3
      %p201 = pnand %p199, %p200
      %p202 = pneg %p201
      // Predicated region
      $region9: #{multihead_attention_forward.4} parent=5 // pred_check
        _
      $region10: #{multihead_attention_forward.4} parent=5 // pred_check_branch
        %204 = sbr.rel (%p201) target = $region12
      $region11: #{multihead_attention_forward.4} parent=5 // pred_region
        %s205 = ssub.s32 %s15, 1
      $region12: #{multihead_attention_forward.4} parent=5 // pred_fallthru
        _
      %p206 = scmp.lt.s32.totalorder %s15, 2
      // Predicated region
      $region13: #{multihead_attention_forward.4} parent=5 // pred_check
        %p207 = pneg %p206
      $region14: #{multihead_attention_forward.4} parent=5 // pred_check_branch
        %209 = sbr.rel (%p207) target = $region16
      $region15: #{multihead_attention_forward.4} parent=5 // pred_region
        // Predicated region
        $region17: #{multihead_attention_forward.4} parent=15 // pred_check
          %p210 = pneg %p49
        $region18: #{multihead_attention_forward.4} parent=15 // pred_check_branch
          %212 = sbr.rel (%p210) target = $region20
        $region19: #{multihead_attention_forward.4} parent=15 // pred_region
          %s213 = sand.u32 %s39, 1
          %s214 = sand.u32 %s39, 1
          %s215 = smul.addr %s214, 32
          %s216 = scalar_lea.vmem [#allocation2], %s215
          %s217 = smul.u32 8, %s23
          %s218 = smul.addr %s22, 3
          %s219 = smul.addr %s217, 6
          %s220 = sadd.s32 %s218, %s219
          %s221 = smul.addr %s220, 4
          %s222 = scalar_lea.vmem %s0, %s221
          // Predicated region
          $region21: #{multihead_attention_forward.4} parent=19 // pred_check
            _
          $region22: #{multihead_attention_forward.4} parent=19 // pred_check_branch
            %224 = sbr.rel (0) target = $region24
          $region23: #{multihead_attention_forward.4} parent=19 // pred_region
            // Predicated region
            $region25: #{multihead_attention_forward.4} parent=23 // pred_check
              _
            $region26: #{multihead_attention_forward.4} parent=23 // pred_check_branch
              %226 = sbr.rel target = $region28
            $region27: #{multihead_attention_forward.4} parent=23 // pred_region
              // Predicated region
              $region40: #{multihead_attention_forward.4} parent=27 // pred_check
                _
              $region41: #{multihead_attention_forward.4} parent=27 // pred_check_branch
                %256 = sbr.rel (0) target = $region43
              $region42: #{multihead_attention_forward.4} parent=27 // pred_region
                loop: start=0, step=1, limit=1
                $region44: #{multihead_attention_forward.4} parent=42 // loop_pre_header
                  _
                $region45: #{multihead_attention_forward.4} parent=42 // loop_header
                  %s258 = sphi 0, %s262
                  %p259 = scmp.ge.s32.totalorder %s258, 1
                  %s263 = sphi %s222, %s222
                  %s264 = sphi %s216, %s216
                $region46: #{multihead_attention_forward.4} parent=42 // loop_header_branch
                  %261 = sbr.rel (%p259) target = $region50
                $region47: #{multihead_attention_forward.4} parent=42 // loop_body
                  _
                $region48: #{multihead_attention_forward.4} parent=42 // loop_footer
                  %s262 = sadd.s32 1, %s258
                $region49: #{multihead_attention_forward.4} parent=42 // loop_footer_branch
                  %257 = sbr.rel target = $region45
                $region50: #{multihead_attention_forward.4} parent=42 // loop_exit
                  _
                %s266 = ssub.s32 16, 1
                loop: start=0, step=1, limit=1
                $region51: #{multihead_attention_forward.4} parent=42 // loop_pre_header
                  _
                $region52: #{multihead_attention_forward.4} parent=42 // loop_header
                  %s268 = sphi 0, %s272
                  %p269 = scmp.ge.s32.totalorder %s268, 1
                  %s273 = sphi %s222, %s222
                  %s274 = sphi %s216, %s216
                $region53: #{multihead_attention_forward.4} parent=42 // loop_header_branch
                  %271 = sbr.rel (%p269) target = $region57
                $region54: #{multihead_attention_forward.4} parent=42 // loop_body
                  %v275 = vld [vmem:[%s273] sm:%s266]
                  %276 = vst [vmem:[%s274] sm:%s266] %v275
                  %v277 = vld [vmem:[%s273 + $0x18] sm:%s266]
                  %278 = vst [vmem:[%s274 + $0x4] sm:%s266] %v277
                  %v279 = vld [vmem:[%s273 + $0x30] sm:%s266]
                  %280 = vst [vmem:[%s274 + $0x8] sm:%s266] %v279
                  %v281 = vld [vmem:[%s273 + $0x48] sm:%s266]
                  %282 = vst [vmem:[%s274 + $0xc] sm:%s266] %v281
                  %v283 = vld [vmem:[%s273 + $0x60] sm:%s266]
                  %284 = vst [vmem:[%s274 + $0x10] sm:%s266] %v283
                  %v285 = vld [vmem:[%s273 + $0x78] sm:%s266]
                  %286 = vst [vmem:[%s274 + $0x14] sm:%s266] %v285
                  %v287 = vld [vmem:[%s273 + $0x90] sm:%s266]
                  %288 = vst [vmem:[%s274 + $0x18] sm:%s266] %v287
                  %v289 = vld [vmem:[%s273 + $0xa8] sm:%s266]
                  %290 = vst [vmem:[%s274 + $0x1c] sm:%s266] %v289
                $region55: #{multihead_attention_forward.4} parent=42 // loop_footer
                  %s272 = sadd.s32 1, %s268
                $region56: #{multihead_attention_forward.4} parent=42 // loop_footer_branch
                  %267 = sbr.rel target = $region52
                $region57: #{multihead_attention_forward.4} parent=42 // loop_exit
                  _
              $region43: #{multihead_attention_forward.4} parent=27 // pred_fallthru
                _
            $region28: #{multihead_attention_forward.4} parent=23 // pred_fallthru
              _
            // Predicated region
            $region29: #{multihead_attention_forward.4} parent=23 // pred_check
              _
            $region30: #{multihead_attention_forward.4} parent=23 // pred_check_branch
              %228 = sbr.rel (0) target = $region32
            $region31: #{multihead_attention_forward.4} parent=23 // pred_region
              %s230 = ssub.s32 16, 1
              loop: start=0, step=1, limit=1
              $region33: #{multihead_attention_forward.4} parent=31 // loop_pre_header
                _
              $region34: #{multihead_attention_forward.4} parent=31 // loop_header
                %s232 = sphi 0, %s236
                %p233 = scmp.ge.s32.totalorder %s232, 1
                %s237 = sphi %s222, %s222
                %s238 = sphi %s216, %s216
              $region35: #{multihead_attention_forward.4} parent=31 // loop_header_branch
                %235 = sbr.rel (%p233) target = $region39
              $region36: #{multihead_attention_forward.4} parent=31 // loop_body
                %v239 = vld [vmem:[%s237] sm:%s230]
                %240 = vst [vmem:[%s238] sm:%s230] %v239
                %v241 = vld [vmem:[%s237 + $0x18] sm:%s230]
                %242 = vst [vmem:[%s238 + $0x4] sm:%s230] %v241
                %v243 = vld [vmem:[%s237 + $0x30] sm:%s230]
                %244 = vst [vmem:[%s238 + $0x8] sm:%s230] %v243
                %v245 = vld [vmem:[%s237 + $0x48] sm:%s230]
                %246 = vst [vmem:[%s238 + $0xc] sm:%s230] %v245
                %v247 = vld [vmem:[%s237 + $0x60] sm:%s230]
                %248 = vst [vmem:[%s238 + $0x10] sm:%s230] %v247
                %v249 = vld [vmem:[%s237 + $0x78] sm:%s230]
                %250 = vst [vmem:[%s238 + $0x14] sm:%s230] %v249
                %v251 = vld [vmem:[%s237 + $0x90] sm:%s230]
                %252 = vst [vmem:[%s238 + $0x18] sm:%s230] %v251
                %v253 = vld [vmem:[%s237 + $0xa8] sm:%s230]
                %254 = vst [vmem:[%s238 + $0x1c] sm:%s230] %v253
              $region37: #{multihead_attention_forward.4} parent=31 // loop_footer
                %s236 = sadd.s32 1, %s232
              $region38: #{multihead_attention_forward.4} parent=31 // loop_footer_branch
                %231 = sbr.rel target = $region34
              $region39: #{multihead_attention_forward.4} parent=31 // loop_exit
                _
            $region32: #{multihead_attention_forward.4} parent=23 // pred_fallthru
              _
          $region24: #{multihead_attention_forward.4} parent=19 // pred_fallthru
            _
          %291 = vnop
        $region20: #{multihead_attention_forward.4} parent=15 // pred_fallthru
          _
        // Predicated region
        $region58: #{multihead_attention_forward.4} parent=15 // pred_check
          %p292 = pneg %p75
        $region59: #{multihead_attention_forward.4} parent=15 // pred_check_branch
          %294 = sbr.rel (%p292) target = $region61
        $region60: #{multihead_attention_forward.4} parent=15 // pred_region
          %s295 = sand.u32 %s65, 1
          %s296 = sand.u32 %s65, 1
          %s297 = smul.addr %s296, 32
          %s298 = scalar_lea.vmem [#allocation3], %s297
          %s299 = smul.addr %s22, 3
          %s300 = sadd.s32 1, %s299
          %s301 = smul.addr %s300, 4
          %s302 = scalar_lea.vmem %s1, %s301
          // Predicated region
          $region62: #{multihead_attention_forward.4} parent=60 // pred_check
            _
          $region63: #{multihead_attention_forward.4} parent=60 // pred_check_branch
            %304 = sbr.rel (0) target = $region65
          $region64: #{multihead_attention_forward.4} parent=60 // pred_region
            // Predicated region
            $region66: #{multihead_attention_forward.4} parent=64 // pred_check
              _
            $region67: #{multihead_attention_forward.4} parent=64 // pred_check_branch
              %306 = sbr.rel target = $region69
            $region68: #{multihead_attention_forward.4} parent=64 // pred_region
              // Predicated region
              $region81: #{multihead_attention_forward.4} parent=68 // pred_check
                _
              $region82: #{multihead_attention_forward.4} parent=68 // pred_check_branch
                %336 = sbr.rel (0) target = $region84
              $region83: #{multihead_attention_forward.4} parent=68 // pred_region
                loop: start=0, step=1, limit=1
                $region85: #{multihead_attention_forward.4} parent=83 // loop_pre_header
                  _
                $region86: #{multihead_attention_forward.4} parent=83 // loop_header
                  %s338 = sphi 0, %s342
                  %p339 = scmp.ge.s32.totalorder %s338, 1
                  %s343 = sphi %s302, %s302
                  %s344 = sphi %s298, %s298
                $region87: #{multihead_attention_forward.4} parent=83 // loop_header_branch
                  %341 = sbr.rel (%p339) target = $region91
                $region88: #{multihead_attention_forward.4} parent=83 // loop_body
                  _
                $region89: #{multihead_attention_forward.4} parent=83 // loop_footer
                  %s342 = sadd.s32 1, %s338
                $region90: #{multihead_attention_forward.4} parent=83 // loop_footer_branch
                  %337 = sbr.rel target = $region86
                $region91: #{multihead_attention_forward.4} parent=83 // loop_exit
                  _
                %s346 = ssub.s32 16, 1
                loop: start=0, step=1, limit=1
                $region92: #{multihead_attention_forward.4} parent=83 // loop_pre_header
                  _
                $region93: #{multihead_attention_forward.4} parent=83 // loop_header
                  %s348 = sphi 0, %s352
                  %p349 = scmp.ge.s32.totalorder %s348, 1
                  %s353 = sphi %s302, %s302
                  %s354 = sphi %s298, %s298
                $region94: #{multihead_attention_forward.4} parent=83 // loop_header_branch
                  %351 = sbr.rel (%p349) target = $region98
                $region95: #{multihead_attention_forward.4} parent=83 // loop_body
                  %v355 = vld [vmem:[%s353] sm:%s346]
                  %356 = vst [vmem:[%s354] sm:%s346] %v355
                  %v357 = vld [vmem:[%s353 + $0x18] sm:%s346]
                  %358 = vst [vmem:[%s354 + $0x4] sm:%s346] %v357
                  %v359 = vld [vmem:[%s353 + $0x30] sm:%s346]
                  %360 = vst [vmem:[%s354 + $0x8] sm:%s346] %v359
                  %v361 = vld [vmem:[%s353 + $0x48] sm:%s346]
                  %362 = vst [vmem:[%s354 + $0xc] sm:%s346] %v361
                  %v363 = vld [vmem:[%s353 + $0x60] sm:%s346]
                  %364 = vst [vmem:[%s354 + $0x10] sm:%s346] %v363
                  %v365 = vld [vmem:[%s353 + $0x78] sm:%s346]
                  %366 = vst [vmem:[%s354 + $0x14] sm:%s346] %v365
                  %v367 = vld [vmem:[%s353 + $0x90] sm:%s346]
                  %368 = vst [vmem:[%s354 + $0x18] sm:%s346] %v367
                  %v369 = vld [vmem:[%s353 + $0xa8] sm:%s346]
                  %370 = vst [vmem:[%s354 + $0x1c] sm:%s346] %v369
                $region96: #{multihead_attention_forward.4} parent=83 // loop_footer
                  %s352 = sadd.s32 1, %s348
                $region97: #{multihead_attention_forward.4} parent=83 // loop_footer_branch
                  %347 = sbr.rel target = $region93
                $region98: #{multihead_attention_forward.4} parent=83 // loop_exit
                  _
              $region84: #{multihead_attention_forward.4} parent=68 // pred_fallthru
                _
            $region69: #{multihead_attention_forward.4} parent=64 // pred_fallthru
              _
            // Predicated region
            $region70: #{multihead_attention_forward.4} parent=64 // pred_check
              _
            $region71: #{multihead_attention_forward.4} parent=64 // pred_check_branch
              %308 = sbr.rel (0) target = $region73
            $region72: #{multihead_attention_forward.4} parent=64 // pred_region
              %s310 = ssub.s32 16, 1
              loop: start=0, step=1, limit=1
              $region74: #{multihead_attention_forward.4} parent=72 // loop_pre_header
                _
              $region75: #{multihead_attention_forward.4} parent=72 // loop_header
                %s312 = sphi 0, %s316
                %p313 = scmp.ge.s32.totalorder %s312, 1
                %s317 = sphi %s302, %s302
                %s318 = sphi %s298, %s298
              $region76: #{multihead_attention_forward.4} parent=72 // loop_header_branch
                %315 = sbr.rel (%p313) target = $region80
              $region77: #{multihead_attention_forward.4} parent=72 // loop_body
                %v319 = vld [vmem:[%s317] sm:%s310]
                %320 = vst [vmem:[%s318] sm:%s310] %v319
                %v321 = vld [vmem:[%s317 + $0x18] sm:%s310]
                %322 = vst [vmem:[%s318 + $0x4] sm:%s310] %v321
                %v323 = vld [vmem:[%s317 + $0x30] sm:%s310]
                %324 = vst [vmem:[%s318 + $0x8] sm:%s310] %v323
                %v325 = vld [vmem:[%s317 + $0x48] sm:%s310]
                %326 = vst [vmem:[%s318 + $0xc] sm:%s310] %v325
                %v327 = vld [vmem:[%s317 + $0x60] sm:%s310]
                %328 = vst [vmem:[%s318 + $0x10] sm:%s310] %v327
                %v329 = vld [vmem:[%s317 + $0x78] sm:%s310]
                %330 = vst [vmem:[%s318 + $0x14] sm:%s310] %v329
                %v331 = vld [vmem:[%s317 + $0x90] sm:%s310]
                %332 = vst [vmem:[%s318 + $0x18] sm:%s310] %v331
                %v333 = vld [vmem:[%s317 + $0xa8] sm:%s310]
                %334 = vst [vmem:[%s318 + $0x1c] sm:%s310] %v333
              $region78: #{multihead_attention_forward.4} parent=72 // loop_footer
                %s316 = sadd.s32 1, %s312
              $region79: #{multihead_attention_forward.4} parent=72 // loop_footer_branch
                %311 = sbr.rel target = $region75
              $region80: #{multihead_attention_forward.4} parent=72 // loop_exit
                _
            $region73: #{multihead_attention_forward.4} parent=64 // pred_fallthru
              _
          $region65: #{multihead_attention_forward.4} parent=60 // pred_fallthru
            _
          %371 = vnop
        $region61: #{multihead_attention_forward.4} parent=15 // pred_fallthru
          _
        // Predicated region
        $region99: #{multihead_attention_forward.4} parent=15 // pred_check
          %p372 = pneg %p101
        $region100: #{multihead_attention_forward.4} parent=15 // pred_check_branch
          %374 = sbr.rel (%p372) target = $region102
        $region101: #{multihead_attention_forward.4} parent=15 // pred_region
          %s375 = sand.u32 %s91, 1
          %s376 = sand.u32 %s91, 1
          %s377 = smul.addr %s376, 32
          %s378 = scalar_lea.vmem [#allocation4], %s377
          %s379 = smul.addr %s22, 3
          %s380 = sadd.s32 2, %s379
          %s381 = smul.addr %s380, 4
          %s382 = scalar_lea.vmem %s2, %s381
          // Predicated region
          $region103: #{multihead_attention_forward.4} parent=101 // pred_check
            _
          $region104: #{multihead_attention_forward.4} parent=101 // pred_check_branch
            %384 = sbr.rel (0) target = $region106
          $region105: #{multihead_attention_forward.4} parent=101 // pred_region
            // Predicated region
            $region107: #{multihead_attention_forward.4} parent=105 // pred_check
              _
            $region108: #{multihead_attention_forward.4} parent=105 // pred_check_branch
              %386 = sbr.rel target = $region110
            $region109: #{multihead_attention_forward.4} parent=105 // pred_region
              // Predicated region
              $region122: #{multihead_attention_forward.4} parent=109 // pred_check
                _
              $region123: #{multihead_attention_forward.4} parent=109 // pred_check_branch
                %416 = sbr.rel (0) target = $region125
              $region124: #{multihead_attention_forward.4} parent=109 // pred_region
                loop: start=0, step=1, limit=1
                $region126: #{multihead_attention_forward.4} parent=124 // loop_pre_header
                  _
                $region127: #{multihead_attention_forward.4} parent=124 // loop_header
                  %s418 = sphi 0, %s422
                  %p419 = scmp.ge.s32.totalorder %s418, 1
                  %s423 = sphi %s382, %s382
                  %s424 = sphi %s378, %s378
                $region128: #{multihead_attention_forward.4} parent=124 // loop_header_branch
                  %421 = sbr.rel (%p419) target = $region132
                $region129: #{multihead_attention_forward.4} parent=124 // loop_body
                  _
                $region130: #{multihead_attention_forward.4} parent=124 // loop_footer
                  %s422 = sadd.s32 1, %s418
                $region131: #{multihead_attention_forward.4} parent=124 // loop_footer_branch
                  %417 = sbr.rel target = $region127
                $region132: #{multihead_attention_forward.4} parent=124 // loop_exit
                  _
                %s426 = ssub.s32 16, 1
                loop: start=0, step=1, limit=1
                $region133: #{multihead_attention_forward.4} parent=124 // loop_pre_header
                  _
                $region134: #{multihead_attention_forward.4} parent=124 // loop_header
                  %s428 = sphi 0, %s432
                  %p429 = scmp.ge.s32.totalorder %s428, 1
                  %s433 = sphi %s382, %s382
                  %s434 = sphi %s378, %s378
                $region135: #{multihead_attention_forward.4} parent=124 // loop_header_branch
                  %431 = sbr.rel (%p429) target = $region139
                $region136: #{multihead_attention_forward.4} parent=124 // loop_body
                  %v435 = vld [vmem:[%s433] sm:%s426]
                  %436 = vst [vmem:[%s434] sm:%s426] %v435
                  %v437 = vld [vmem:[%s433 + $0x18] sm:%s426]
                  %438 = vst [vmem:[%s434 + $0x4] sm:%s426] %v437
                  %v439 = vld [vmem:[%s433 + $0x30] sm:%s426]
                  %440 = vst [vmem:[%s434 + $0x8] sm:%s426] %v439
                  %v441 = vld [vmem:[%s433 + $0x48] sm:%s426]
                  %442 = vst [vmem:[%s434 + $0xc] sm:%s426] %v441
                  %v443 = vld [vmem:[%s433 + $0x60] sm:%s426]
                  %444 = vst [vmem:[%s434 + $0x10] sm:%s426] %v443
                  %v445 = vld [vmem:[%s433 + $0x78] sm:%s426]
                  %446 = vst [vmem:[%s434 + $0x14] sm:%s426] %v445
                  %v447 = vld [vmem:[%s433 + $0x90] sm:%s426]
                  %448 = vst [vmem:[%s434 + $0x18] sm:%s426] %v447
                  %v449 = vld [vmem:[%s433 + $0xa8] sm:%s426]
                  %450 = vst [vmem:[%s434 + $0x1c] sm:%s426] %v449
                $region137: #{multihead_attention_forward.4} parent=124 // loop_footer
                  %s432 = sadd.s32 1, %s428
                $region138: #{multihead_attention_forward.4} parent=124 // loop_footer_branch
                  %427 = sbr.rel target = $region134
                $region139: #{multihead_attention_forward.4} parent=124 // loop_exit
                  _
              $region125: #{multihead_attention_forward.4} parent=109 // pred_fallthru
                _
            $region110: #{multihead_attention_forward.4} parent=105 // pred_fallthru
              _
            // Predicated region
            $region111: #{multihead_attention_forward.4} parent=105 // pred_check
              _
            $region112: #{multihead_attention_forward.4} parent=105 // pred_check_branch
              %388 = sbr.rel (0) target = $region114
            $region113: #{multihead_attention_forward.4} parent=105 // pred_region
              %s390 = ssub.s32 16, 1
              loop: start=0, step=1, limit=1
              $region115: #{multihead_attention_forward.4} parent=113 // loop_pre_header
                _
              $region116: #{multihead_attention_forward.4} parent=113 // loop_header
                %s392 = sphi 0, %s396
                %p393 = scmp.ge.s32.totalorder %s392, 1
                %s397 = sphi %s382, %s382
                %s398 = sphi %s378, %s378
              $region117: #{multihead_attention_forward.4} parent=113 // loop_header_branch
                %395 = sbr.rel (%p393) target = $region121
              $region118: #{multihead_attention_forward.4} parent=113 // loop_body
                %v399 = vld [vmem:[%s397] sm:%s390]
                %400 = vst [vmem:[%s398] sm:%s390] %v399
                %v401 = vld [vmem:[%s397 + $0x18] sm:%s390]
                %402 = vst [vmem:[%s398 + $0x4] sm:%s390] %v401
                %v403 = vld [vmem:[%s397 + $0x30] sm:%s390]
                %404 = vst [vmem:[%s398 + $0x8] sm:%s390] %v403
                %v405 = vld [vmem:[%s397 + $0x48] sm:%s390]
                %406 = vst [vmem:[%s398 + $0xc] sm:%s390] %v405
                %v407 = vld [vmem:[%s397 + $0x60] sm:%s390]
                %408 = vst [vmem:[%s398 + $0x10] sm:%s390] %v407
                %v409 = vld [vmem:[%s397 + $0x78] sm:%s390]
                %410 = vst [vmem:[%s398 + $0x14] sm:%s390] %v409
                %v411 = vld [vmem:[%s397 + $0x90] sm:%s390]
                %412 = vst [vmem:[%s398 + $0x18] sm:%s390] %v411
                %v413 = vld [vmem:[%s397 + $0xa8] sm:%s390]
                %414 = vst [vmem:[%s398 + $0x1c] sm:%s390] %v413
              $region119: #{multihead_attention_forward.4} parent=113 // loop_footer
                %s396 = sadd.s32 1, %s392
              $region120: #{multihead_attention_forward.4} parent=113 // loop_footer_branch
                %391 = sbr.rel target = $region116
              $region121: #{multihead_attention_forward.4} parent=113 // loop_exit
                _
            $region114: #{multihead_attention_forward.4} parent=105 // pred_fallthru
              _
          $region106: #{multihead_attention_forward.4} parent=101 // pred_fallthru
            _
          %451 = vnop
        $region102: #{multihead_attention_forward.4} parent=15 // pred_fallthru
          _
        // Predicated region
        $region140: #{multihead_attention_forward.4} parent=15 // pred_check
          %p452 = pneg %p129
        $region141: #{multihead_attention_forward.4} parent=15 // pred_check_branch
          %454 = sbr.rel (%p452) target = $region143
        $region142: #{multihead_attention_forward.4} parent=15 // pred_region
          %p455 = scmp.lt.s32.totalorder %s22, 1
          %s456 = scalar_select %p455, %s22, 1
          %p457 = scmp.lt.s32.totalorder %s23, 0
          %s458 = scalar_select %p457, %s23, 0
          %s459 = smul.addr %s456, 4
          %s460 = sadd.s32 %s458, %s459
          %s461 = smul.addr %s460, 8
          %s462 = scalar_lea.vmem %s3, %s461
        $region143: #{multihead_attention_forward.4} parent=15 // pred_fallthru
          _
      $region16: #{multihead_attention_forward.4} parent=5 // pred_fallthru
        _
      %p463 = scmp.le.s32.totalorder 1, %s15
      %p464 = scmp.lt.s32.totalorder %s15, 3
      %p465 = pnand %p463, %p464
      %p466 = pneg %p465
      // Predicated region
      $region144: #{multihead_attention_forward.4} parent=5 // pred_check
        _
      $region145: #{multihead_attention_forward.4} parent=5 // pred_check_branch
        %468 = sbr.rel (%p465) target = $region147
      $region146: #{multihead_attention_forward.4} parent=5 // pred_region
        %s469 = ssub.s32 %s15, 1
        %s470 = sand.u32 %s42, 1
        %s471 = sand.u32 %s42, 1
        %s472 = smul.addr %s471, 32
        %s473 = scalar_lea.vmem [#allocation2], %s472
        // Predicated region
        $region148: #{multihead_attention_forward.4} parent=146 // pred_check
          %p474 = pneg %p55
        $region149: #{multihead_attention_forward.4} parent=146 // pred_check_branch
          %476 = sbr.rel (%p474) target = $region151
        $region150: #{multihead_attention_forward.4} parent=146 // pred_region
          _
        $region151: #{multihead_attention_forward.4} parent=146 // pred_fallthru
          _
        %s477 = sand.u32 %s68, 1
        %s478 = sand.u32 %s68, 1
        %s479 = smul.addr %s478, 32
        %s480 = scalar_lea.vmem [#allocation3], %s479
        // Predicated region
        $region152: #{multihead_attention_forward.4} parent=146 // pred_check
          %p481 = pneg %p81
        $region153: #{multihead_attention_forward.4} parent=146 // pred_check_branch
          %483 = sbr.rel (%p481) target = $region155
        $region154: #{multihead_attention_forward.4} parent=146 // pred_region
          _
        $region155: #{multihead_attention_forward.4} parent=146 // pred_fallthru
          _
        %s484 = sand.u32 %s94, 1
        %s485 = sand.u32 %s94, 1
        %s486 = smul.addr %s485, 32
        %s487 = scalar_lea.vmem [#allocation4], %s486
        // Predicated region
        $region156: #{multihead_attention_forward.4} parent=146 // pred_check
          %p488 = pneg %p107
        $region157: #{multihead_attention_forward.4} parent=146 // pred_check_branch
          %490 = sbr.rel (%p488) target = $region159
        $region158: #{multihead_attention_forward.4} parent=146 // pred_region
          _
        $region159: #{multihead_attention_forward.4} parent=146 // pred_fallthru
          _
        %s491 = sand.u32 %s42, 1
        %s492 = sand.u32 %s42, 1
        %s493 = smul.addr %s492, 32
        %s494 = scalar_lea.vmem [#allocation2], %s493
        %p495 = pneg %p55
        %p496 = pneg %p52
        %s497 = sand.u32 %s68, 1
        %s498 = sand.u32 %s68, 1
        %s499 = smul.addr %s498, 32
        %s500 = scalar_lea.vmem [#allocation3], %s499
        %p501 = pneg %p81
        %p502 = pneg %p78
        %s503 = sand.u32 %s94, 1
        %s504 = sand.u32 %s94, 1
        %s505 = smul.addr %s504, 32
        %s506 = scalar_lea.vmem [#allocation4], %s505
        %p507 = pneg %p107
        %p508 = pneg %p104
        %p509 = scmp.lt.s32.totalorder %s24, 1
        %s510 = scalar_select %p509, %s24, 1
        %p511 = scmp.lt.s32.totalorder %s25, 0
        %s512 = scalar_select %p511, %s25, 0
        %s513 = smul.addr %s510, 4
        %s514 = sadd.s32 %s512, %s513
        %s515 = smul.addr %s514, 8
        %s516 = scalar_lea.vmem %s3, %s515
        %p517 = pneg %p135
        %p518 = pneg %p132
        %p519 = pneg %p163
        %p520 = pneg %p160
        %s521 = sand.u32 %s150, 1
        %s522 = sand.u32 %s150, 1
        %s523 = smul.addr %s522, 32
        %s524 = scalar_lea.vmem [#allocation5], %s523
        %p525 = pneg %p191
        %p526 = pneg %p188
        %s527 = sand.u32 %s178, 1
        %s528 = scalar_lea.sflag [#allocation7], %s527
        %s529 = sand.u32 %s178, 1
        %s530 = smul.addr %s529, 8
        %s531 = scalar_lea.vmem [#allocation6], %s530
        %s532 = smul.u32 8, %s25
        %p533 = scmp.lt.s32.totalorder %s24, 1
        %s534 = scalar_select %p533, %s24, 1
        %p535 = scmp.lt.s32.totalorder %s25, 0
        %s536 = scalar_select %p535, %s25, 0
        %s537 = smul.addr %s534, 4
        %s538 = sadd.s32 %s536, %s537
        %s539 = smul.addr %s538, 8
        %s540 = scalar_lea.vmem %s3, %s539
        %s541 = smul.u32 8, %s25
        %v542 = vld [vmem:[%s473] sm:$0xf]
        %v543 = vld [vmem:[%s473 + $0x4] sm:$0xf]
        %v544 = vld [vmem:[%s473 + $0x8] sm:$0xf]
        %v545 = vld [vmem:[%s473 + $0xc] sm:$0xf]
        %v546 = vld [vmem:[%s473 + $0x10] sm:$0xf]
        %v547 = vld [vmem:[%s473 + $0x14] sm:$0xf]
        %v548 = vld [vmem:[%s473 + $0x18] sm:$0xf]
        %v549 = vld [vmem:[%s473 + $0x1c] sm:$0xf]
        %v550 = vrot.slane %v544, 4
        %vm551 = vcmask 1047556
        %v552 = vsel %vm551, %v550, %v542
        %v554 = vunpack.c.l.s4 1983009808
        %v555 = vunpack.c.0.s8 %v554
        %v556 = vperm.slane %v552, %v555
        %v557 = vrot.slane %v545, 4
        %v558 = vsel %vm551, %v557, %v543
        %v560 = vunpack.c.l.s4 1983009808
        %v561 = vunpack.c.0.s8 %v560
        %v562 = vperm.slane %v558, %v561
        %v563 = vrot.slane %v548, 4
        %v564 = vsel %vm551, %v563, %v546
        %v566 = vunpack.c.l.s4 1983009808
        %v567 = vunpack.c.0.s8 %v566
        %v568 = vperm.slane %v564, %v567
        %v569 = vrot.slane %v549, 4
        %v570 = vsel %vm551, %v569, %v547
        %v572 = vunpack.c.l.s4 1983009808
        %v573 = vunpack.c.0.s8 %v572
        %v574 = vperm.slane %v570, %v573
        %v575 = vrot.slane %v562, 4
        %v576 = vsel %vm551, %v575, %v556
        %v577 = vrot.slane %v556, 4
        %v578 = vsel %vm551, %v562, %v577
        %v580 = vunpack.c.l.s4 1934713408
        %v581 = vunpack.c.0.s8 %v580
        %v582 = vperm.slane %v576, %v581
        %v584 = vunpack.c.l.s4 1934713408
        %v585 = vunpack.c.0.s8 %v584
        %v586 = vperm.slane %v578, %v585
        %v587 = vrot.slane %v574, 4
        %v588 = vsel %vm551, %v587, %v568
        %v589 = vrot.slane %v568, 4
        %v590 = vsel %vm551, %v574, %v589
        %v592 = vunpack.c.l.s4 1934713408
        %v593 = vunpack.c.0.s8 %v592
        %v594 = vperm.slane %v588, %v593
        %v596 = vunpack.c.l.s4 1934713408
        %v597 = vunpack.c.0.s8 %v596
        %v598 = vperm.slane %v590, %v597
        %v599 = vrot.slane %v594, 4
        %v600 = vsel %vm551, %v599, %v582
        %v601 = vrot.slane %v582, 4
        %v602 = vsel %vm551, %v594, %v601
        %v603 = vrot.slane %v598, 4
        %v604 = vsel %vm551, %v603, %v586
        %v605 = vrot.slane %v586, 4
        %v606 = vsel %vm551, %v598, %v605
        %v607 = vmul.f32 %v600, 0.35355338
        %v608 = vmul.f32 %v602, 0.35355338
        %v609 = vmul.f32 %v604, 0.35355338
        %v610 = vmul.f32 %v606, 0.35355338
        %v611 = vld [vmem:[%s480] sm:$0xf]
        %v612 = vld [vmem:[%s480 + $0x4] sm:$0xf]
        %v613 = vld [vmem:[%s480 + $0x8] sm:$0xf]
        %v614 = vld [vmem:[%s480 + $0xc] sm:$0xf]
        %v615 = vld [vmem:[%s480 + $0x10] sm:$0xf]
        %v616 = vld [vmem:[%s480 + $0x14] sm:$0xf]
        %v617 = vld [vmem:[%s480 + $0x18] sm:$0xf]
        %v618 = vld [vmem:[%s480 + $0x1c] sm:$0xf]
        %v619 = vrot.slane %v613, 4
        %v620 = vsel %vm551, %v619, %v611
        %v622 = vunpack.c.l.s4 1983009808
        %v623 = vunpack.c.0.s8 %v622
        %v624 = vperm.slane %v620, %v623
        %v625 = vrot.slane %v614, 4
        %v626 = vsel %vm551, %v625, %v612
        %v628 = vunpack.c.l.s4 1983009808
        %v629 = vunpack.c.0.s8 %v628
        %v630 = vperm.slane %v626, %v629
        %v631 = vrot.slane %v617, 4
        %v632 = vsel %vm551, %v631, %v615
        %v634 = vunpack.c.l.s4 1983009808
        %v635 = vunpack.c.0.s8 %v634
        %v636 = vperm.slane %v632, %v635
        %v637 = vrot.slane %v618, 4
        %v638 = vsel %vm551, %v637, %v616
        %v640 = vunpack.c.l.s4 1983009808
        %v641 = vunpack.c.0.s8 %v640
        %v642 = vperm.slane %v638, %v641
        %v643 = vrot.slane %v630, 4
        %v644 = vsel %vm551, %v643, %v624
        %v645 = vrot.slane %v624, 4
        %v646 = vsel %vm551, %v630, %v645
        %v648 = vunpack.c.l.s4 1934713408
        %v649 = vunpack.c.0.s8 %v648
        %v650 = vperm.slane %v644, %v649
        %v652 = vunpack.c.l.s4 1934713408
        %v653 = vunpack.c.0.s8 %v652
        %v654 = vperm.slane %v646, %v653
        %v655 = vrot.slane %v642, 4
        %v656 = vsel %vm551, %v655, %v636
        %v657 = vrot.slane %v636, 4
        %v658 = vsel %vm551, %v642, %v657
        %v660 = vunpack.c.l.s4 1934713408
        %v661 = vunpack.c.0.s8 %v660
        %v662 = vperm.slane %v656, %v661
        %v664 = vunpack.c.l.s4 1934713408
        %v665 = vunpack.c.0.s8 %v664
        %v666 = vperm.slane %v658, %v665
        %v667 = vrot.slane %v662, 4
        %v668 = vsel %vm551, %v667, %v650
        %v669 = vrot.slane %v650, 4
        %v670 = vsel %vm551, %v662, %v669
        %v671 = vrot.slane %v666, 4
        %v672 = vsel %vm551, %v671, %v654
        %v673 = vrot.slane %v654, 4
        %v674 = vsel %vm551, %v666, %v673
        %v675 = vld [vmem:[%s487] sm:$0xf]
        %v676 = vld [vmem:[%s487 + $0x4] sm:$0xf]
        %v677 = vld [vmem:[%s487 + $0x8] sm:$0xf]
        %v678 = vld [vmem:[%s487 + $0xc] sm:$0xf]
        %v679 = vld [vmem:[%s487 + $0x10] sm:$0xf]
        %v680 = vld [vmem:[%s487 + $0x14] sm:$0xf]
        %v681 = vld [vmem:[%s487 + $0x18] sm:$0xf]
        %v682 = vld [vmem:[%s487 + $0x1c] sm:$0xf]
        %v683 = vrot.slane %v677, 4
        %v684 = vsel %vm551, %v683, %v675
        %v686 = vunpack.c.l.s4 1983009808
        %v687 = vunpack.c.0.s8 %v686
        %v688 = vperm.slane %v684, %v687
        %v689 = vrot.slane %v678, 4
        %v690 = vsel %vm551, %v689, %v676
        %v692 = vunpack.c.l.s4 1983009808
        %v693 = vunpack.c.0.s8 %v692
        %v694 = vperm.slane %v690, %v693
        %v695 = vrot.slane %v681, 4
        %v696 = vsel %vm551, %v695, %v679
        %v698 = vunpack.c.l.s4 1983009808
        %v699 = vunpack.c.0.s8 %v698
        %v700 = vperm.slane %v696, %v699
        %v701 = vrot.slane %v682, 4
        %v702 = vsel %vm551, %v701, %v680
        %v704 = vunpack.c.l.s4 1983009808
        %v705 = vunpack.c.0.s8 %v704
        %v706 = vperm.slane %v702, %v705
        %v707 = vrot.slane %v694, 4
        %v708 = vsel %vm551, %v707, %v688
        %v709 = vrot.slane %v688, 4
        %v710 = vsel %vm551, %v694, %v709
        %v712 = vunpack.c.l.s4 1934713408
        %v713 = vunpack.c.0.s8 %v712
        %v714 = vperm.slane %v708, %v713
        %v716 = vunpack.c.l.s4 1934713408
        %v717 = vunpack.c.0.s8 %v716
        %v718 = vperm.slane %v710, %v717
        %v719 = vrot.slane %v706, 4
        %v720 = vsel %vm551, %v719, %v700
        %v721 = vrot.slane %v700, 4
        %v722 = vsel %vm551, %v706, %v721
        %v724 = vunpack.c.l.s4 1934713408
        %v725 = vunpack.c.0.s8 %v724
        %v726 = vperm.slane %v720, %v725
        %v728 = vunpack.c.l.s4 1934713408
        %v729 = vunpack.c.0.s8 %v728
        %v730 = vperm.slane %v722, %v729
        %v731 = vrot.slane %v726, 4
        %v732 = vsel %vm551, %v731, %v714
        %v733 = vrot.slane %v714, 4
        %v734 = vsel %vm551, %v726, %v733
        %v735 = vrot.slane %v730, 4
        %v736 = vsel %vm551, %v735, %v718
        %v737 = vrot.slane %v718, 4
        %v738 = vsel %vm551, %v730, %v737
        %v739 = vld [vmem:[%s540] sm:$0xff]
        %v740 = vld [vmem:[%s540 + $0x8] sm:$0xff]
        %v741 = vld [vmem:[%s540 + $0x10] sm:$0xff]
        %v742 = vld [vmem:[%s540 + $0x18] sm:$0xff]
        %vm743 = vcmask 64512
        %v745 = vsel %vm743, %v607, 0
        %v748 = vsel %vm743, %v668, 0
        %750 = vmatpush.xpose.msra.mxu0 0.0
        %751 = vmatpush.xpose.msra.mxu0 0.0
        %752 = vmatpush.xpose.msra.mxu0 0.0
        %753 = vmatpush.xpose.msra.mxu0 0.0
        %754 = vmatpush.xpose.msra.mxu0 0.0
        %755 = vmatpush.xpose.msra.mxu0 0.0
        %756 = vmatpush.xpose.msra.mxu0 0.0
        %757 = vmatpush.xpose.msra.mxu0 0.0
        %758 = vmatpush.xpose.msra.mxu0 0.0
        %759 = vmatpush.xpose.msra.mxu0 0.0
        %760 = vmatpush.xpose.msra.mxu0 0.0
        %761 = vmatpush.xpose.msra.mxu0 0.0
        %762 = vmatpush.xpose.msra.mxu0 0.0
        %763 = vmatpush.xpose.msra.mxu0 0.0
        %764 = vmatpush.xpose.msra.mxu0 0.0
        %765 = vmatpush.xpose.msra.mxu0 %v748
        %766 = vmatmul.f32.gmra.mxu0 %v745
        %v767 = vpop.f32.mrf.mxu0
        %v768 = vadd.f32 %v739, %v767
        %769 = vdwg.mxu0
        %v771 = vsel %vm743, %v608, 0
        %v774 = vsel %vm743, %v670, 0
        %776 = vmatpush.xpose.msra.mxu0 0.0
        %777 = vmatpush.xpose.msra.mxu0 0.0
        %778 = vmatpush.xpose.msra.mxu0 0.0
        %779 = vmatpush.xpose.msra.mxu0 0.0
        %780 = vmatpush.xpose.msra.mxu0 0.0
        %781 = vmatpush.xpose.msra.mxu0 0.0
        %782 = vmatpush.xpose.msra.mxu0 0.0
        %783 = vmatpush.xpose.msra.mxu0 0.0
        %784 = vmatpush.xpose.msra.mxu0 0.0
        %785 = vmatpush.xpose.msra.mxu0 0.0
        %786 = vmatpush.xpose.msra.mxu0 0.0
        %787 = vmatpush.xpose.msra.mxu0 0.0
        %788 = vmatpush.xpose.msra.mxu0 0.0
        %789 = vmatpush.xpose.msra.mxu0 0.0
        %790 = vmatpush.xpose.msra.mxu0 0.0
        %791 = vmatpush.xpose.msra.mxu0 %v774
        %792 = vmatmul.f32.gmra.mxu0 %v771
        %v793 = vpop.f32.mrf.mxu0
        %v794 = vadd.f32 %v740, %v793
        %795 = vdwg.mxu0
        %v797 = vsel %vm743, %v609, 0
        %v800 = vsel %vm743, %v672, 0
        %802 = vmatpush.xpose.msra.mxu0 0.0
        %803 = vmatpush.xpose.msra.mxu0 0.0
        %804 = vmatpush.xpose.msra.mxu0 0.0
        %805 = vmatpush.xpose.msra.mxu0 0.0
        %806 = vmatpush.xpose.msra.mxu0 0.0
        %807 = vmatpush.xpose.msra.mxu0 0.0
        %808 = vmatpush.xpose.msra.mxu0 0.0
        %809 = vmatpush.xpose.msra.mxu0 0.0
        %810 = vmatpush.xpose.msra.mxu0 0.0
        %811 = vmatpush.xpose.msra.mxu0 0.0
        %812 = vmatpush.xpose.msra.mxu0 0.0
        %813 = vmatpush.xpose.msra.mxu0 0.0
        %814 = vmatpush.xpose.msra.mxu0 0.0
        %815 = vmatpush.xpose.msra.mxu0 0.0
        %816 = vmatpush.xpose.msra.mxu0 0.0
        %817 = vmatpush.xpose.msra.mxu0 %v800
        %818 = vmatmul.f32.gmra.mxu0 %v797
        %v819 = vpop.f32.mrf.mxu0
        %v820 = vadd.f32 %v741, %v819
        %821 = vdwg.mxu0
        %v823 = vsel %vm743, %v610, 0
        %v826 = vsel %vm743, %v674, 0
        %828 = vmatpush.xpose.msra.mxu0 0.0
        %829 = vmatpush.xpose.msra.mxu0 0.0
        %830 = vmatpush.xpose.msra.mxu0 0.0
        %831 = vmatpush.xpose.msra.mxu0 0.0
        %832 = vmatpush.xpose.msra.mxu0 0.0
        %833 = vmatpush.xpose.msra.mxu0 0.0
        %834 = vmatpush.xpose.msra.mxu0 0.0
        %835 = vmatpush.xpose.msra.mxu0 0.0
        %836 = vmatpush.xpose.msra.mxu0 0.0
        %837 = vmatpush.xpose.msra.mxu0 0.0
        %838 = vmatpush.xpose.msra.mxu0 0.0
        %839 = vmatpush.xpose.msra.mxu0 0.0
        %840 = vmatpush.xpose.msra.mxu0 0.0
        %841 = vmatpush.xpose.msra.mxu0 0.0
        %842 = vmatpush.xpose.msra.mxu0 0.0
        %843 = vmatpush.xpose.msra.mxu0 %v826
        %844 = vmatmul.f32.gmra.mxu0 %v823
        %v845 = vpop.f32.mrf.mxu0
        %v846 = vadd.f32 %v742, %v845
        %847 = vdwg.mxu0
        %v848 = vsel %vm743, %v768, -inf
        %849 = vmax.xlane.f32.xlu0 %v848
        %v850 = vpop.xlane.xlu0 %849
        %v851 = vsel %vm743, %v794, -inf
        %852 = vmax.xlane.f32.xlu0 %v851
        %v853 = vpop.xlane.xlu0 %852
        %v854 = vsel %vm743, %v820, -inf
        %855 = vmax.xlane.f32.xlu0 %v854
        %v856 = vpop.xlane.xlu0 %855
        %v857 = vsel %vm743, %v846, -inf
        %858 = vmax.xlane.f32.xlu0 %v857
        %v859 = vpop.xlane.xlu0 %858
        %v860 = vsub.f32 %v768, %v850
        %v861 = vsub.f32 %v794, %v853
        %v862 = vsub.f32 %v820, %v856
        %v863 = vsub.f32 %v846, %v859
        %v864 = vmul.f32 %v860, 1.442695
        %v865 = vpow.pop %v864
        %v866 = vmul.f32 %v861, 1.442695
        %v867 = vpow.pop %v866
        %v868 = vmul.f32 %v862, 1.442695
        %v869 = vpow.pop %v868
        %v870 = vmul.f32 %v863, 1.442695
        %v871 = vpow.pop %v870
        %v872 = vsel %vm743, %v865, 0.0
        %873 = vadd.xlane.f32.xlu0 %v872
        %v874 = vpop.xlane.xlu0 %873
        %v875 = vsel %vm743, %v867, 0.0
        %876 = vadd.xlane.f32.xlu0 %v875
        %v877 = vpop.xlane.xlu0 %876
        %v878 = vsel %vm743, %v869, 0.0
        %879 = vadd.xlane.f32.xlu0 %v878
        %v880 = vpop.xlane.xlu0 %879
        %v881 = vsel %vm743, %v871, 0.0
        %882 = vadd.xlane.f32.xlu0 %v881
        %v883 = vpop.xlane.xlu0 %882
        %v884 = vrcp.pop %v874
        %v885 = vmul.f32 %v874, %v884
        %v886 = vsub.f32 1.0, %v885
        %v887 = vmul.f32 %v884, %v886
        %v888 = vadd.f32 %v884, %v887
        %vm889 = vweird.f32 %v874
        %vm890 = vweird.f32 %v884
        %vm891 = vmor %vm889, %vm890
        %v892 = vsel %vm891, %v884, %v888
        %v893 = vand.u32 2147483647, %v874
        %vm894 = vcmp.eq.f32.partialorder %v893, 8.507059e+37
        %v895 = vand.u32 %v874, 2147483648
        %v896 = vor.u32 1.1754944e-38, %v895
        %v897 = vsel %vm894, %v896, %v892
        %v898 = vrcp.pop %v877
        %v899 = vmul.f32 %v877, %v898
        %v900 = vsub.f32 1.0, %v899
        %v901 = vmul.f32 %v898, %v900
        %v902 = vadd.f32 %v898, %v901
        %vm903 = vweird.f32 %v877
        %vm904 = vweird.f32 %v898
        %vm905 = vmor %vm903, %vm904
        %v906 = vsel %vm905, %v898, %v902
        %v907 = vand.u32 2147483647, %v877
        %vm908 = vcmp.eq.f32.partialorder %v907, 8.507059e+37
        %v909 = vand.u32 %v877, 2147483648
        %v910 = vor.u32 1.1754944e-38, %v909
        %v911 = vsel %vm908, %v910, %v906
        %v912 = vrcp.pop %v880
        %v913 = vmul.f32 %v880, %v912
        %v914 = vsub.f32 1.0, %v913
        %v915 = vmul.f32 %v912, %v914
        %v916 = vadd.f32 %v912, %v915
        %vm917 = vweird.f32 %v880
        %vm918 = vweird.f32 %v912
        %vm919 = vmor %vm917, %vm918
        %v920 = vsel %vm919, %v912, %v916
        %v921 = vand.u32 2147483647, %v880
        %vm922 = vcmp.eq.f32.partialorder %v921, 8.507059e+37
        %v923 = vand.u32 %v880, 2147483648
        %v924 = vor.u32 1.1754944e-38, %v923
        %v925 = vsel %vm922, %v924, %v920
        %v926 = vrcp.pop %v883
        %v927 = vmul.f32 %v883, %v926
        %v928 = vsub.f32 1.0, %v927
        %v929 = vmul.f32 %v926, %v928
        %v930 = vadd.f32 %v926, %v929
        %vm931 = vweird.f32 %v883
        %vm932 = vweird.f32 %v926
        %vm933 = vmor %vm931, %vm932
        %v934 = vsel %vm933, %v926, %v930
        %v935 = vand.u32 2147483647, %v883
        %vm936 = vcmp.eq.f32.partialorder %v935, 8.507059e+37
        %v937 = vand.u32 %v883, 2147483648
        %v938 = vor.u32 1.1754944e-38, %v937
        %v939 = vsel %vm936, %v938, %v934
        %v940 = vmul.f32 %v865, %v897
        %v941 = vmul.f32 %v867, %v911
        %v942 = vmul.f32 %v869, %v925
        %v943 = vmul.f32 %v871, %v939
        %v945 = vsel %vm743, %v940, 0
        %947 = vmatpush.msra.mxu0 0.0
        %948 = vmatpush.msra.mxu0 0.0
        %949 = vmatpush.msra.mxu0 0.0
        %950 = vmatpush.msra.mxu0 0.0
        %951 = vmatpush.msra.mxu0 0.0
        %952 = vmatpush.msra.mxu0 0.0
        %953 = vmatpush.msra.mxu0 0.0
        %954 = vmatpush.msra.mxu0 0.0
        %955 = vmatpush.msra.mxu0 0.0
        %956 = vmatpush.msra.mxu0 0.0
        %957 = vmatpush.msra.mxu0 0.0
        %958 = vmatpush.msra.mxu0 0.0
        %959 = vmatpush.msra.mxu0 0.0
        %960 = vmatpush.msra.mxu0 0.0
        %961 = vmatpush.msra.mxu0 0.0
        %962 = vmatpush.msra.mxu0 %v732
        %963 = vmatmul.f32.gmra.mxu0 %v945
        %v964 = vpop.f32.mrf.mxu0
        %v965 = vadd.f32 0.0, %v964
        %966 = vdwg.mxu0
        %v968 = vsel %vm743, %v941, 0
        %970 = vmatpush.msra.mxu0 0.0
        %971 = vmatpush.msra.mxu0 0.0
        %972 = vmatpush.msra.mxu0 0.0
        %973 = vmatpush.msra.mxu0 0.0
        %974 = vmatpush.msra.mxu0 0.0
        %975 = vmatpush.msra.mxu0 0.0
        %976 = vmatpush.msra.mxu0 0.0
        %977 = vmatpush.msra.mxu0 0.0
        %978 = vmatpush.msra.mxu0 0.0
        %979 = vmatpush.msra.mxu0 0.0
        %980 = vmatpush.msra.mxu0 0.0
        %981 = vmatpush.msra.mxu0 0.0
        %982 = vmatpush.msra.mxu0 0.0
        %983 = vmatpush.msra.mxu0 0.0
        %984 = vmatpush.msra.mxu0 0.0
        %985 = vmatpush.msra.mxu0 %v734
        %986 = vmatmul.f32.gmra.mxu0 %v968
        %v987 = vpop.f32.mrf.mxu0
        %v988 = vadd.f32 0.0, %v987
        %989 = vdwg.mxu0
        %v991 = vsel %vm743, %v942, 0
        %993 = vmatpush.msra.mxu0 0.0
        %994 = vmatpush.msra.mxu0 0.0
        %995 = vmatpush.msra.mxu0 0.0
        %996 = vmatpush.msra.mxu0 0.0
        %997 = vmatpush.msra.mxu0 0.0
        %998 = vmatpush.msra.mxu0 0.0
        %999 = vmatpush.msra.mxu0 0.0
        %1000 = vmatpush.msra.mxu0 0.0
        %1001 = vmatpush.msra.mxu0 0.0
        %1002 = vmatpush.msra.mxu0 0.0
        %1003 = vmatpush.msra.mxu0 0.0
        %1004 = vmatpush.msra.mxu0 0.0
        %1005 = vmatpush.msra.mxu0 0.0
        %1006 = vmatpush.msra.mxu0 0.0
        %1007 = vmatpush.msra.mxu0 0.0
        %1008 = vmatpush.msra.mxu0 %v736
        %1009 = vmatmul.f32.gmra.mxu0 %v991
        %v1010 = vpop.f32.mrf.mxu0
        %v1011 = vadd.f32 0.0, %v1010
        %1012 = vdwg.mxu0
        %v1014 = vsel %vm743, %v943, 0
        %1016 = vmatpush.msra.mxu0 0.0
        %1017 = vmatpush.msra.mxu0 0.0
        %1018 = vmatpush.msra.mxu0 0.0
        %1019 = vmatpush.msra.mxu0 0.0
        %1020 = vmatpush.msra.mxu0 0.0
        %1021 = vmatpush.msra.mxu0 0.0
        %1022 = vmatpush.msra.mxu0 0.0
        %1023 = vmatpush.msra.mxu0 0.0
        %1024 = vmatpush.msra.mxu0 0.0
        %1025 = vmatpush.msra.mxu0 0.0
        %1026 = vmatpush.msra.mxu0 0.0
        %1027 = vmatpush.msra.mxu0 0.0
        %1028 = vmatpush.msra.mxu0 0.0
        %1029 = vmatpush.msra.mxu0 0.0
        %1030 = vmatpush.msra.mxu0 0.0
        %1031 = vmatpush.msra.mxu0 %v738
        %1032 = vmatmul.f32.gmra.mxu0 %v1014
        %v1033 = vpop.f32.mrf.mxu0
        %v1034 = vadd.f32 0.0, %v1033
        %1035 = vdwg.mxu0
        %v1036 = vrot.slane %v1011, 4
        %v1037 = vsel %vm551, %v1036, %v965
        %v1038 = vrot.slane %v965, 4
        %v1039 = vsel %vm551, %v1011, %v1038
        %v1041 = vunpack.c.l.s4 1983009808
        %v1042 = vunpack.c.0.s8 %v1041
        %v1043 = vperm.slane %v1037, %v1042
        %v1045 = vunpack.c.l.s4 1983009808
        %v1046 = vunpack.c.0.s8 %v1045
        %v1047 = vperm.slane %v1039, %v1046
        %v1048 = vrot.slane %v1034, 4
        %v1049 = vsel %vm551, %v1048, %v988
        %v1050 = vrot.slane %v988, 4
        %v1051 = vsel %vm551, %v1034, %v1050
        %v1053 = vunpack.c.l.s4 1983009808
        %v1054 = vunpack.c.0.s8 %v1053
        %v1055 = vperm.slane %v1049, %v1054
        %v1057 = vunpack.c.l.s4 1983009808
        %v1058 = vunpack.c.0.s8 %v1057
        %v1059 = vperm.slane %v1051, %v1058
        %v1060 = vrot.slane %v1055, 4
        %v1061 = vsel %vm551, %v1060, %v1043
        %v1062 = vrot.slane %v1043, 4
        %v1063 = vsel %vm551, %v1055, %v1062
        %v1065 = vunpack.c.l.s4 1934713408
        %v1066 = vunpack.c.0.s8 %v1065
        %v1067 = vperm.slane %v1061, %v1066
        %v1069 = vunpack.c.l.s4 1934713408
        %v1070 = vunpack.c.0.s8 %v1069
        %v1071 = vperm.slane %v1063, %v1070
        %v1072 = vrot.slane %v1059, 4
        %v1073 = vsel %vm551, %v1072, %v1047
        %v1074 = vrot.slane %v1047, 4
        %v1075 = vsel %vm551, %v1059, %v1074
        %v1077 = vunpack.c.l.s4 1934713408
        %v1078 = vunpack.c.0.s8 %v1077
        %v1079 = vperm.slane %v1073, %v1078
        %v1081 = vunpack.c.l.s4 1934713408
        %v1082 = vunpack.c.0.s8 %v1081
        %v1083 = vperm.slane %v1075, %v1082
        %v1084 = vrot.slane %v1067, 4
        %v1085 = vsel %vm551, 0.0, %v1084
        %v1086 = vrot.slane %v1071, 4
        %v1087 = vsel %vm551, 0.0, %v1086
        %v1088 = vrot.slane %v1079, 4
        %v1089 = vsel %vm551, 0.0, %v1088
        %v1090 = vrot.slane %v1083, 4
        %v1091 = vsel %vm551, 0.0, %v1090
        %vm1092 = vcmask 60416
        %1093 = vst.msk [vmem:[%s524] sm:$0xf] %vm1092, %v1067
        %1094 = vst.msk [vmem:[%s524 + $0x4] sm:$0xf] %vm1092, %v1085
        %1095 = vst.msk [vmem:[%s524 + $0x8] sm:$0xf] %vm1092, %v1071
        %1096 = vst.msk [vmem:[%s524 + $0xc] sm:$0xf] %vm1092, %v1087
        %1097 = vst.msk [vmem:[%s524 + $0x10] sm:$0xf] %vm1092, %v1079
        %1098 = vst.msk [vmem:[%s524 + $0x14] sm:$0xf] %vm1092, %v1089
        %1099 = vst.msk [vmem:[%s524 + $0x18] sm:$0xf] %vm1092, %v1083
        %1100 = vst.msk [vmem:[%s524 + $0x1c] sm:$0xf] %vm1092, %v1091
        %v1101 = vsel %vm743, %v940, 0.0
        %v1102 = vsel %vm743, %v941, 0.0
        %v1103 = vadd.f32 %v1101, %v1102
        %v1104 = vsel %vm743, %v942, 0.0
        %v1105 = vadd.f32 %v1103, %v1104
        %v1106 = vsel %vm743, %v943, 0.0
        %v1107 = vadd.f32 %v1105, %v1106
        %v1108 = vmul.f32 %v1107, 0.25
        %1109 = vst.msk [vmem:[%s531] sm:$0xff] %vm743, %v1108
        %s1110 = sand.u32 %s150, 1
        %s1111 = sand.u32 %s150, 1
        %s1112 = smul.addr %s1111, 32
        %s1113 = scalar_lea.vmem [#allocation5], %s1112
        %s1114 = sand.u32 %s178, 1
        %s1115 = scalar_lea.sflag [#allocation7], %s1114
        %s1116 = sand.u32 %s178, 1
        %s1117 = smul.addr %s1116, 8
        %s1118 = scalar_lea.vmem [#allocation6], %s1117
        // Predicated region
        $region160: #{multihead_attention_forward.4} parent=146 // pred_check
          %p1119 = pneg %p160
        $region161: #{multihead_attention_forward.4} parent=146 // pred_check_branch
          %1121 = sbr.rel (%p1119) target = $region163
        $region162: #{multihead_attention_forward.4} parent=146 // pred_region
          %s1122 = smul.u32 8, %s25
          %s1123 = smul.addr %s1122, 2
          %s1124 = sadd.s32 %s24, %s1123
          %s1125 = smul.addr %s1124, 4
          %s1126 = scalar_lea.vmem %s4, %s1125
          // Predicated region
          $region164: #{multihead_attention_forward.4} parent=162 // pred_check
            _
          $region165: #{multihead_attention_forward.4} parent=162 // pred_check_branch
            %1128 = sbr.rel (0) target = $region167
          $region166: #{multihead_attention_forward.4} parent=162 // pred_region
            // Predicated region
            $region168: #{multihead_attention_forward.4} parent=166 // pred_check
              _
            $region169: #{multihead_attention_forward.4} parent=166 // pred_check_branch
              %1130 = sbr.rel target = $region171
            $region170: #{multihead_attention_forward.4} parent=166 // pred_region
              // Predicated region
              $region183: #{multihead_attention_forward.4} parent=170 // pred_check
                _
              $region184: #{multihead_attention_forward.4} parent=170 // pred_check_branch
                %1160 = sbr.rel (0) target = $region186
              $region185: #{multihead_attention_forward.4} parent=170 // pred_region
                loop: start=0, step=1, limit=1
                $region187: #{multihead_attention_forward.4} parent=185 // loop_pre_header
                  _
                $region188: #{multihead_attention_forward.4} parent=185 // loop_header
                  %s1162 = sphi 0, %s1166
                  %p1163 = scmp.ge.s32.totalorder %s1162, 1
                  %s1167 = sphi %s1113, %s1113
                  %s1168 = sphi %s1126, %s1126
                $region189: #{multihead_attention_forward.4} parent=185 // loop_header_branch
                  %1165 = sbr.rel (%p1163) target = $region193
                $region190: #{multihead_attention_forward.4} parent=185 // loop_body
                  _
                $region191: #{multihead_attention_forward.4} parent=185 // loop_footer
                  %s1166 = sadd.s32 1, %s1162
                $region192: #{multihead_attention_forward.4} parent=185 // loop_footer_branch
                  %1161 = sbr.rel target = $region188
                $region193: #{multihead_attention_forward.4} parent=185 // loop_exit
                  _
                %s1170 = ssub.s32 16, 1
                loop: start=0, step=1, limit=1
                $region194: #{multihead_attention_forward.4} parent=185 // loop_pre_header
                  _
                $region195: #{multihead_attention_forward.4} parent=185 // loop_header
                  %s1172 = sphi 0, %s1176
                  %p1173 = scmp.ge.s32.totalorder %s1172, 1
                  %s1177 = sphi %s1113, %s1113
                  %s1178 = sphi %s1126, %s1126
                $region196: #{multihead_attention_forward.4} parent=185 // loop_header_branch
                  %1175 = sbr.rel (%p1173) target = $region200
                $region197: #{multihead_attention_forward.4} parent=185 // loop_body
                  %v1179 = vld [vmem:[%s1177] sm:%s1170]
                  %1180 = vst [vmem:[%s1178] sm:%s1170] %v1179
                  %v1181 = vld [vmem:[%s1177 + $0x4] sm:%s1170]
                  %1182 = vst [vmem:[%s1178 + $0x8] sm:%s1170] %v1181
                  %v1183 = vld [vmem:[%s1177 + $0x8] sm:%s1170]
                  %1184 = vst [vmem:[%s1178 + $0x10] sm:%s1170] %v1183
                  %v1185 = vld [vmem:[%s1177 + $0xc] sm:%s1170]
                  %1186 = vst [vmem:[%s1178 + $0x18] sm:%s1170] %v1185
                  %v1187 = vld [vmem:[%s1177 + $0x10] sm:%s1170]
                  %1188 = vst [vmem:[%s1178 + $0x20] sm:%s1170] %v1187
                  %v1189 = vld [vmem:[%s1177 + $0x14] sm:%s1170]
                  %1190 = vst [vmem:[%s1178 + $0x28] sm:%s1170] %v1189
                  %v1191 = vld [vmem:[%s1177 + $0x18] sm:%s1170]
                  %1192 = vst [vmem:[%s1178 + $0x30] sm:%s1170] %v1191
                  %v1193 = vld [vmem:[%s1177 + $0x1c] sm:%s1170]
                  %1194 = vst [vmem:[%s1178 + $0x38] sm:%s1170] %v1193
                $region198: #{multihead_attention_forward.4} parent=185 // loop_footer
                  %s1176 = sadd.s32 1, %s1172
                $region199: #{multihead_attention_forward.4} parent=185 // loop_footer_branch
                  %1171 = sbr.rel target = $region195
                $region200: #{multihead_attention_forward.4} parent=185 // loop_exit
                  _
              $region186: #{multihead_attention_forward.4} parent=170 // pred_fallthru
                _
            $region171: #{multihead_attention_forward.4} parent=166 // pred_fallthru
              _
            // Predicated region
            $region172: #{multihead_attention_forward.4} parent=166 // pred_check
              _
            $region173: #{multihead_attention_forward.4} parent=166 // pred_check_branch
              %1132 = sbr.rel (0) target = $region175
            $region174: #{multihead_attention_forward.4} parent=166 // pred_region
              %s1134 = ssub.s32 16, 1
              loop: start=0, step=1, limit=1
              $region176: #{multihead_attention_forward.4} parent=174 // loop_pre_header
                _
              $region177: #{multihead_attention_forward.4} parent=174 // loop_header
                %s1136 = sphi 0, %s1140
                %p1137 = scmp.ge.s32.totalorder %s1136, 1
                %s1141 = sphi %s1113, %s1113
                %s1142 = sphi %s1126, %s1126
              $region178: #{multihead_attention_forward.4} parent=174 // loop_header_branch
                %1139 = sbr.rel (%p1137) target = $region182
              $region179: #{multihead_attention_forward.4} parent=174 // loop_body
                %v1143 = vld [vmem:[%s1141] sm:%s1134]
                %1144 = vst [vmem:[%s1142] sm:%s1134] %v1143
                %v1145 = vld [vmem:[%s1141 + $0x4] sm:%s1134]
                %1146 = vst [vmem:[%s1142 + $0x8] sm:%s1134] %v1145
                %v1147 = vld [vmem:[%s1141 + $0x8] sm:%s1134]
                %1148 = vst [vmem:[%s1142 + $0x10] sm:%s1134] %v1147
                %v1149 = vld [vmem:[%s1141 + $0xc] sm:%s1134]
                %1150 = vst [vmem:[%s1142 + $0x18] sm:%s1134] %v1149
                %v1151 = vld [vmem:[%s1141 + $0x10] sm:%s1134]
                %1152 = vst [vmem:[%s1142 + $0x20] sm:%s1134] %v1151
                %v1153 = vld [vmem:[%s1141 + $0x14] sm:%s1134]
                %1154 = vst [vmem:[%s1142 + $0x28] sm:%s1134] %v1153
                %v1155 = vld [vmem:[%s1141 + $0x18] sm:%s1134]
                %1156 = vst [vmem:[%s1142 + $0x30] sm:%s1134] %v1155
                %v1157 = vld [vmem:[%s1141 + $0x1c] sm:%s1134]
                %1158 = vst [vmem:[%s1142 + $0x38] sm:%s1134] %v1157
              $region180: #{multihead_attention_forward.4} parent=174 // loop_footer
                %s1140 = sadd.s32 1, %s1136
              $region181: #{multihead_attention_forward.4} parent=174 // loop_footer_branch
                %1135 = sbr.rel target = $region177
              $region182: #{multihead_attention_forward.4} parent=174 // loop_exit
                _
            $region175: #{multihead_attention_forward.4} parent=166 // pred_fallthru
              _
          $region167: #{multihead_attention_forward.4} parent=162 // pred_fallthru
            _
          %1195 = vnop
        $region163: #{multihead_attention_forward.4} parent=146 // pred_fallthru
          _
        // Predicated region
        $region201: #{multihead_attention_forward.4} parent=146 // pred_check
          %p1196 = pneg %p188
        $region202: #{multihead_attention_forward.4} parent=146 // pred_check_branch
          %1198 = sbr.rel (%p1196) target = $region204
        $region203: #{multihead_attention_forward.4} parent=146 // pred_region
          %1200 = vsyncadd %s1115, 0
          %s1201 = sadd.s32 %s25, %s24
          %s1202 = smul.addr %s1201, 8
          %s1203 = scalar_lea.hbm %s5, %s1202
          %s1205 = sshll.u32 %s1118, 4
          %s1206 = int_to_ptr.vmem [resolvable:$true] %s1205
          %s1207 = sshll.u32 %s1203, 4
          %s1208 = int_to_ptr.hbm [resolvable:$true] %s1207
          %1210 = dma.vmem_to_hbm [thread:$0]  %s1206, 128, %s1208, %s1115
        $region204: #{multihead_attention_forward.4} parent=146 // pred_fallthru
          _
      $region147: #{multihead_attention_forward.4} parent=5 // pred_fallthru
        _
      %p1211 = scmp.le.s32.totalorder 2, %s15
      // Predicated region
      $region205: #{multihead_attention_forward.4} parent=5 // pred_check
        %p1212 = pneg %p1211
      $region206: #{multihead_attention_forward.4} parent=5 // pred_check_branch
        %1214 = sbr.rel (%p1212) target = $region208
      $region207: #{multihead_attention_forward.4} parent=5 // pred_region
        %s1215 = ssub.s32 %s15, 2
        // Predicated region
        $region209: #{multihead_attention_forward.4} parent=207 // pred_check
          %p1216 = pneg %p166
        $region210: #{multihead_attention_forward.4} parent=207 // pred_check_branch
          %1218 = sbr.rel (%p1216) target = $region212
        $region211: #{multihead_attention_forward.4} parent=207 // pred_region
          %s1219 = sand.u32 %s151, 1
          %s1220 = sand.u32 %s151, 1
          %s1221 = smul.addr %s1220, 32
          %s1222 = scalar_lea.vmem [#allocation5], %s1221
        $region212: #{multihead_attention_forward.4} parent=207 // pred_fallthru
          _
        // Predicated region
        $region213: #{multihead_attention_forward.4} parent=207 // pred_check
          %p1223 = pneg %p194
        $region214: #{multihead_attention_forward.4} parent=207 // pred_check_branch
          %1225 = sbr.rel (%p1223) target = $region216
        $region215: #{multihead_attention_forward.4} parent=207 // pred_region
          %s1226 = sand.u32 %s179, 1
          %s1227 = scalar_lea.sflag [#allocation7], %s1226
          %s1228 = sand.u32 %s179, 1
          %s1229 = smul.addr %s1228, 8
          %s1230 = scalar_lea.vmem [#allocation6], %s1229
          %1232 = dma.done %s1227, 128
        $region216: #{multihead_attention_forward.4} parent=207 // pred_fallthru
          _
      $region208: #{multihead_attention_forward.4} parent=5 // pred_fallthru
        _
    $region6: #{multihead_attention_forward.4} parent=1 // loop_footer
      %s19 = sadd.s32 1, %s15
    $region7: #{multihead_attention_forward.4} parent=1 // loop_footer_branch
      %14 = sbr.rel target = $region3
    $region8: #{multihead_attention_forward.4} parent=1 // loop_exit
      _
    %1233 = vsyncpa [#allocation7], 1
    %s1234 = scalar_lea.sflag [#allocation7], 1
    %1235 = vsyncpa %s1234, 1

</llo_original>
